<compile_context>
chip_gen: v7x
topology: tpu7x:2x2x1
jax: 0.10.0
libtpu: 0.0.40
codegen_flags: <defaults>
</compile_context>

<pallas_src>
import functools
import math

import jax
import jax.numpy as jnp
from jax.experimental import pallas as pl
from jax.experimental.pallas import tpu as pltpu

EPS = 1e-5


def _round_up(x, m):
    return (x + m - 1) // m * m


# ---------------------------------------------------------------------------
# Fused ClassBlock kernels (relu=False: scale folded into w1; relu=True: explicit)
# ---------------------------------------------------------------------------

def _classblock_kernel_fold(x_ref, w1_ref, shift_ref, w2_ref, b2_ref, o_ref):
    # Linear + BN(eval) folded into (w1*scale, shift).  Cast x to bf16 in-kernel.
    x = x_ref[...].astype(jnp.bfloat16)
    h = jnp.dot(x, w1_ref[...], preferred_element_type=jnp.float32) + shift_ref[...]
    # Dropout: identity in eval mode.  classifier Linear in bf16 on the MXU.
    o_ref[...] = (jnp.dot(h.astype(jnp.bfloat16), w2_ref[...],
                          preferred_element_type=jnp.float32)
                  + b2_ref[...]).astype(o_ref.dtype)


def _classblock_kernel_relu(x_ref, w1_ref, scale_ref, shift_ref, w2_ref, b2_ref,
                            o_ref):
    x = x_ref[...].astype(jnp.bfloat16)
    h = jnp.dot(x, w1_ref[...], preferred_element_type=jnp.float32)
    h = h * scale_ref[...] + shift_ref[...]         # BN(eval) scale/shift (f32 epilogue)
    h = jnp.maximum(h, 0.1 * h)                     # LeakyReLU(0.1): single VALU op
    o_ref[...] = (jnp.dot(h.astype(jnp.bfloat16), w2_ref[...],
                          preferred_element_type=jnp.float32)
                  + b2_ref[...]).astype(o_ref.dtype)


@functools.partial(jax.jit, static_argnames=("class_num", "relu", "tm"))
def classblock_forward(x, params, *, class_num, relu=False, tm=512):
    """x: (B, input_dim) f32.  params: packed weights from prepare_params(raw, relu)."""
    B, D = x.shape
    Dn = params["w1"].shape[1]
    C_pad = params["w2"].shape[1]

    # Batch tiling: tile a multiple of 8 (f32 sublane).
    tm_eff = min(tm, _round_up(B, 8))
    # v7x has 2 TensorCores: make sure a non-trivial batch produces >=2 grid steps
    # so dimension_semantics=("parallel",) can shard them.
    if B > 8 and _round_up(B, tm_eff) // tm_eff < 2:
        tm_eff = max(8, _round_up((B + 1) // 2, 8))
    M_pad = _round_up(B, tm_eff)
    if M_pad != B:
        x = jnp.pad(x, ((0, M_pad - B), (0, 0)))   # minimal row pad only

    # Constant-index operands: single-buffered (their index_map never changes).
    const = pl.Buffered(1)
    in_specs = [pl.BlockSpec((tm_eff, D), lambda i: (i, 0)),               # x tile (f32)
                pl.BlockSpec((D, Dn), lambda i: (0, 0), pipeline_mode=const)]  # w1 bf16
    operands = [x, params["w1"]]
    if relu:
        in_specs.append(pl.BlockSpec((1, Dn), lambda i: (0, 0), pipeline_mode=const))
        operands.append(params["scale"])
    in_specs += [pl.BlockSpec((1, Dn), lambda i: (0, 0), pipeline_mode=const),      # shift
                 pl.BlockSpec((Dn, C_pad), lambda i: (0, 0), pipeline_mode=const),  # w2 bf16
                 pl.BlockSpec((1, C_pad), lambda i: (0, 0), pipeline_mode=const)]   # b2
    operands += [params["shift"], params["w2"], params["b2"]]

    kernel = _classblock_kernel_relu if relu else _classblock_kernel_fold

    # VMEM need (x tiles double-buffered, weights single-buffered, out double-buffered,
    # h intermediate + bf16 x copy), with 2x headroom, clamped to 48 MiB.
    vmem_need = (2 * tm_eff * D * 4
                 + D * Dn * 2 + Dn * C_pad * 2
                 + 4 * Dn * 4 + C_pad * 4
                 + 2 * tm_eff * C_pad * 4
                 + tm_eff * Dn * 4 + tm_eff * D * 2)
    vmem_limit = int(min(max(2 * vmem_need, 16 << 20), 48 << 20))

    cost = pl.CostEstimate(
        flops=2 * M_pad * D * Dn + 2 * M_pad * Dn * C_pad,
        transcendentals=0,
        bytes_accessed=(M_pad * D * 4 + D * Dn * 2 + Dn * C_pad * 2
                        + M_pad * C_pad * 4 + 3 * Dn * 4 + C_pad * 4))

    out = pl.pallas_call(
        kernel,
        out_shape=jax.ShapeDtypeStruct((M_pad, C_pad), jnp.float32),
        grid=(M_pad // tm_eff,),
        in_specs=in_specs,
        out_specs=pl.BlockSpec((tm_eff, C_pad), lambda i: (i, 0)),
        compiler_params=pltpu.CompilerParams(
            dimension_semantics=("parallel",),      # shard batch across TCs (v7x)
            vmem_limit_bytes=vmem_limit),
        cost_estimate=cost,
    )(*operands)

    return out[:B, :class_num]


# ---------------------------------------------------------------------------
# Parameter init (mirrors the PyTorch weights_init_* functions) + packing
# ---------------------------------------------------------------------------

def init_classblock(key, input_dim, class_num, num_bottleneck=512):
    k1, k2, k3 = jax.random.split(key, 3)
    # Linear(input_dim, num_bottleneck): kaiming_normal mode='fan_out' -> std=sqrt(2/fan_out)
    w1 = jax.random.normal(k1, (input_dim, num_bottleneck), jnp.float32) \
        * math.sqrt(2.0 / num_bottleneck)
    b1 = jnp.zeros((num_bottleneck,), jnp.float32)
    # BatchNorm1d(num_bottleneck): weight ~ N(1.0, 0.02), bias = 0, fresh running stats
    gamma = 1.0 + 0.02 * jax.random.normal(k2, (num_bottleneck,), jnp.float32)
    beta = jnp.zeros((num_bottleneck,), jnp.float32)
    running_mean = jnp.zeros((num_bottleneck,), jnp.float32)
    running_var = jnp.ones((num_bottleneck,), jnp.float32)
    # classifier Linear(num_bottleneck, class_num): weight ~ N(0, 0.001), bias = 0
    w2 = jax.random.normal(k3, (num_bottleneck, class_num), jnp.float32) * 0.001
    b2 = jnp.zeros((class_num,), jnp.float32)
    return dict(w1=w1, b1=b1, gamma=gamma, beta=beta,
                running_mean=running_mean, running_var=running_var, w2=w2, b2=b2)


def prepare_params(p, relu=False):
    """Fold Linear bias + eval-mode BN, pad class dim to a lane-dense multiple of 128,
    cast MXU operands to bf16."""
    D, Dn = p["w1"].shape
    C = p["w2"].shape[1]
    C_pad = _round_up(C, 128)

    scale = p["gamma"] / jnp.sqrt(p["running_var"] + EPS)           # f32
    shift = p["beta"] + scale * (p["b1"] - p["running_mean"])       # b1 folded (exact, f32)

    if relu:
        w1 = p["w1"].astype(jnp.bfloat16)
        packed = dict(scale=scale.reshape(1, Dn))
    else:
        # scale folded into w1 columns (f32 before the bf16 cast)
        w1 = (p["w1"] * scale[None, :]).astype(jnp.bfloat16)
        packed = {}

    w2 = jnp.zeros((Dn, C_pad), jnp.float32).at[:, :C].set(p["w2"]).astype(jnp.bfloat16)
    b2 = jnp.zeros((1, C_pad), jnp.float32).at[0, :C].set(p["b2"])

    packed.update(w1=w1, shift=shift.reshape(1, Dn), w2=w2, b2=b2)
    return packed


# ---------------------------------------------------------------------------
# Pure-JAX reference (same bf16 operand precision) for a correctness check
# ---------------------------------------------------------------------------

def classblock_reference(x, p, relu=False):
    scale = p["gamma"] / jnp.sqrt(p["running_var"] + EPS)
    shift = p["beta"] - p["running_mean"] * scale
    h = jnp.dot(x.astype(jnp.bfloat16), p["w1"].astype(jnp.bfloat16),
                preferred_element_type=jnp.float32) + p["b1"]
    h = h * scale + shift
    if relu:
        h = jnp.where(h > 0.0, h, 0.1 * h)
    return jnp.dot(h.astype(jnp.bfloat16), p["w2"].astype(jnp.bfloat16),
                   preferred_element_type=jnp.float32) + p["b2"]


# ---------------------------------------------------------------------------

if __name__ == "__main__":
    key = jax.random.PRNGKey(0)
    k_par, k_x = jax.random.split(key)

    input_dim, class_num, batch = 1024, 16, 2   # ClassBlock(1024, 16, droprate=0.5)
    raw = init_classblock(k_par, input_dim, class_num)
    x = jax.random.normal(k_x, (batch, input_dim), jnp.float32)

    for relu in (False, True):
        packed = prepare_params(raw, relu=relu)
        out = classblock_forward(x, packed, class_num=class_num, relu=relu)
        out = jax.block_until_ready(out)

        assert out.shape == (batch, class_num), out.shape
        assert bool(jnp.all(jnp.isfinite(out)))

        ref = classblock_reference(x, raw, relu=relu)
        assert bool(jnp.allclose(out, ref, atol=5e-3, rtol=5e-3)), \
            (relu, float(jnp.max(jnp.abs(out - ref))))

    print("KERNEL_OK")
</pallas_src>

<mosaic_0001>
module attributes {stable_mosaic.version = 11 : i64} {
  func.func @_classblock_kernel_fold(%arg0: i32, %arg1: memref<8x1024xf32, #tpu.memory_space<vmem>>, %arg2: memref<1024x512xbf16, #tpu.memory_space<vmem>>, %arg3: memref<1x512xf32, #tpu.memory_space<vmem>>, %arg4: memref<512x128xbf16, #tpu.memory_space<vmem>>, %arg5: memref<1x128xf32, #tpu.memory_space<vmem>>, %arg6: memref<8x128xf32, #tpu.memory_space<vmem>>) attributes {dimension_semantics = [#tpu.dimension_semantics<parallel>], iteration_bounds = array<i64: 1>, scalar_prefetch = 0 : i64, scratch_operands = 0 : i64, tpu.core_type = #tpu.core_type<tc>, window_params = [{transform_indices = @transform_0, window_bounds = array<i64: 8, 1024>}, {pipeline_mode = #tpu.pipeline_mode<synchronous>, transform_indices = @transform_1, window_bounds = array<i64: 1024, 512>}, {pipeline_mode = #tpu.pipeline_mode<synchronous>, transform_indices = @transform_2, window_bounds = array<i64: 1, 512>}, {pipeline_mode = #tpu.pipeline_mode<synchronous>, transform_indices = @transform_3, window_bounds = array<i64: 512, 128>}, {pipeline_mode = #tpu.pipeline_mode<synchronous>, transform_indices = @transform_4, window_bounds = array<i64: 1, 128>}, {transform_indices = @transform_5, window_bounds = array<i64: 8, 128>}]} {
    %c0 = arith.constant 0 : index
    %c0_0 = arith.constant 0 : index
    %0 = vector.load %arg1[%c0, %c0_0] : memref<8x1024xf32, #tpu.memory_space<vmem>>, vector<8x1024xf32>
    %1 = arith.truncf %0 : vector<8x1024xf32> to vector<8x1024xbf16>
    %c0_1 = arith.constant 0 : index
    %c0_2 = arith.constant 0 : index
    %2 = vector.load %arg2[%c0_1, %c0_2] : memref<1024x512xbf16, #tpu.memory_space<vmem>>, vector<1024x512xbf16>
    %cst = arith.constant dense<0.000000e+00> : vector<8x512xf32>
    %3 = tpu.matmul %1, %2, %cst {dimension_numbers = #tpu.dot_dimension_numbers<[1], [0], [0], [1], [0, 0, 1, 1], [], []>} : vector<8x1024xbf16>, vector<1024x512xbf16>, vector<8x512xf32> -> vector<8x512xf32>
    %c0_3 = arith.constant 0 : index
    %c0_4 = arith.constant 0 : index
    %4 = vector.load %arg3[%c0_3, %c0_4] : memref<1x512xf32, #tpu.memory_space<vmem>>, vector<1x512xf32>
    %5 = vector.broadcast %4 : vector<1x512xf32> to vector<8x512xf32>
    %6 = arith.addf %3, %5 : vector<8x512xf32>
    %7 = arith.truncf %6 : vector<8x512xf32> to vector<8x512xbf16>
    %c0_5 = arith.constant 0 : index
    %c0_6 = arith.constant 0 : index
    %8 = vector.load %arg4[%c0_5, %c0_6] : memref<512x128xbf16, #tpu.memory_space<vmem>>, vector<512x128xbf16>
    %cst_7 = arith.constant dense<0.000000e+00> : vector<8x128xf32>
    %9 = tpu.matmul %7, %8, %cst_7 {dimension_numbers = #tpu.dot_dimension_numbers<[1], [0], [0], [1], [0, 0, 1, 1], [], []>} : vector<8x512xbf16>, vector<512x128xbf16>, vector<8x128xf32> -> vector<8x128xf32>
    %c0_8 = arith.constant 0 : index
    %c0_9 = arith.constant 0 : index
    %10 = vector.load %arg5[%c0_8, %c0_9] : memref<1x128xf32, #tpu.memory_space<vmem>>, vector<1x128xf32>
    %11 = vector.broadcast %10 : vector<1x128xf32> to vector<8x128xf32>
    %12 = arith.addf %9, %11 : vector<8x128xf32>
    %c0_10 = arith.constant 0 : index
    %c0_11 = arith.constant 0 : index
    %13 = vector.load %arg6[%c0_10, %c0_11] : memref<8x128xf32, #tpu.memory_space<vmem>>, vector<8x128xf32>
    tpu.vector_store %arg6[%c0_10, %c0_11], %12 {strides = array<i32>} : memref<8x128xf32, #tpu.memory_space<vmem>>, vector<8x128xf32>,
    return
  }
  func.func @transform_0(%arg0: i32) -> (i32, i32) {
    %c0_i32 = arith.constant 0 : i32
    %c0_i32_0 = arith.constant 0 : i32
    return %arg0, %c0_i32 : i32, i32
  }
  func.func @transform_1(%arg0: i32) -> (i32, i32) {
    %c0_i32 = arith.constant 0 : i32
    %c0_i32_0 = arith.constant 0 : i32
    %c0_i32_1 = arith.constant 0 : i32
    return %c0_i32, %c0_i32_0 : i32, i32
  }
  func.func @transform_2(%arg0: i32) -> (i32, i32) {
    %c0_i32 = arith.constant 0 : i32
    %c0_i32_0 = arith.constant 0 : i32
    %c0_i32_1 = arith.constant 0 : i32
    return %c0_i32, %c0_i32_0 : i32, i32
  }
  func.func @transform_3(%arg0: i32) -> (i32, i32) {
    %c0_i32 = arith.constant 0 : i32
    %c0_i32_0 = arith.constant 0 : i32
    %c0_i32_1 = arith.constant 0 : i32
    return %c0_i32, %c0_i32_0 : i32, i32
  }
  func.func @transform_4(%arg0: i32) -> (i32, i32) {
    %c0_i32 = arith.constant 0 : i32
    %c0_i32_0 = arith.constant 0 : i32
    %c0_i32_1 = arith.constant 0 : i32
    return %c0_i32, %c0_i32_0 : i32, i32
  }
  func.func @transform_5(%arg0: i32) -> (i32, i32) {
    %c0_i32 = arith.constant 0 : i32
    %c0_i32_0 = arith.constant 0 : i32
    return %arg0, %c0_i32 : i32, i32
  }
}

</mosaic_0001>

<llo_original>
// kernel: classblock_forward.1
$region0: #{classblock_forward.1}
  #allocation0 [shape = 'u32[]', space=smem, size = 0x4, offset = 0x4, fixed_abs, tag = 'smem constant byte address 0x4 - core index']
  #allocation1 [shape = 'u32[144,128]{1,0:T(1,128)}', space=vmem, size = 0x12000, scoped, tag = 'internal scratch']
  %s0 = inlined_call_operand.vmem [shape: f32[8,1024], index: 0, kind: input, shape index: {}]
  %s1 = inlined_call_operand.hbm [shape: bf16[1024,512], index: 1, kind: input, shape index: {}]
  %s2 = inlined_call_operand.vmem [shape: f32[1,512], index: 2, kind: input, shape index: {}]
  %s3 = inlined_call_operand.hbm [shape: bf16[512,128], index: 3, kind: input, shape index: {}]
  %s4 = inlined_call_operand.vmem [shape: f32[1,128], index: 4, kind: input, shape index: {}]
  %s5 = inlined_call_operand.vmem [shape: f32[8,128], index: 5, kind: output, shape index: {}]
  %s6 = sld [smem:[#allocation0]]
  $region38: #{classblock_forward.1} parent=0
    _
  %s8 = ssub.s32 1, %s6
  %s9 = scalar_select 0, %s8, %s6
  $region1: #{classblock_forward.1} parent=0
    #allocation2 [shape = 'u8[1048576]{0}', space=vmem, size = 0x100000, scoped, tag = 'input window, operand 1, single buffered']
    #allocation3 [shape = 's32[1]{0}', space=sflag, size = 0x4, scoped, tag = 'scoped memory for classblock_forward.1']
    #allocation4 [shape = 'u8[131072]{0}', space=vmem, size = 0x20000, scoped, tag = 'input window, operand 3, single buffered']
    #allocation5 [shape = 's32[1]{0}', space=sflag, size = 0x4, scoped, tag = 'scoped memory for classblock_forward.1']
    %10 = vsyncpa [#allocation3], 0
    %11 = vsyncpa [#allocation5], 0
    // Predicated region
    $region2: #{classblock_forward.1} parent=1 // pred_check
      _
    $region3: #{classblock_forward.1} parent=1 // pred_check_branch
      %13 = sbr.rel (0) target = $region5
    $region4: #{classblock_forward.1} parent=1 // pred_region
      _
    $region5: #{classblock_forward.1} parent=1 // pred_fallthru
      _
    // Predicated region
    $region6: #{classblock_forward.1} parent=1 // pred_check
      _
    $region7: #{classblock_forward.1} parent=1 // pred_check_branch
      %15 = sbr.rel (0) target = $region9
    $region8: #{classblock_forward.1} parent=1 // pred_region
      %s17 = ssub.s32 32768, 32768
      %18 = vsyncadd [#allocation3], %s17
      %s19 = sshll.u32 [#allocation2], 4
      %s20 = int_to_ptr.vmem [resolvable:$true] %s19
      %25 = dma.hbm_to_vmem [thread:$0]  %s1, 32768, %s20, [#allocation3], 256, 256, 16
    $region9: #{classblock_forward.1} parent=1 // pred_fallthru
      _
    // Predicated region
    $region10: #{classblock_forward.1} parent=1 // pred_check
      _
    $region11: #{classblock_forward.1} parent=1 // pred_check_branch
      %27 = sbr.rel (0) target = $region13
    $region12: #{classblock_forward.1} parent=1 // pred_region
      _
    $region13: #{classblock_forward.1} parent=1 // pred_fallthru
      _
    // Predicated region
    $region14: #{classblock_forward.1} parent=1 // pred_check
      _
    $region15: #{classblock_forward.1} parent=1 // pred_check_branch
      %29 = sbr.rel (0) target = $region17
    $region16: #{classblock_forward.1} parent=1 // pred_region
      %s31 = ssub.s32 4096, 4096
      %32 = vsyncadd [#allocation5], %s31
      %s33 = sshll.u32 [#allocation4], 4
      %s34 = int_to_ptr.vmem [resolvable:$true] %s33
      %39 = dma.hbm_to_vmem [thread:$0]  %s3, 4096, %s34, [#allocation5], 64, 64, 4
    $region17: #{classblock_forward.1} parent=1 // pred_fallthru
      _
    // Predicated region
    $region18: #{classblock_forward.1} parent=1 // pred_check
      _
    $region19: #{classblock_forward.1} parent=1 // pred_check_branch
      %41 = sbr.rel (0) target = $region21
    $region20: #{classblock_forward.1} parent=1 // pred_region
      _
    $region21: #{classblock_forward.1} parent=1 // pred_fallthru
      _
    // Predicated region
    $region22: #{classblock_forward.1} parent=1 // pred_check
      _
    $region23: #{classblock_forward.1} parent=1 // pred_check_branch
      %43 = sbr.rel (0) target = $region25
    $region24: #{classblock_forward.1} parent=1 // pred_region
      %44 = dma.done [#allocation3], 32768
    $region25: #{classblock_forward.1} parent=1 // pred_fallthru
      _
    // Predicated region
    $region26: #{classblock_forward.1} parent=1 // pred_check
      _
    $region27: #{classblock_forward.1} parent=1 // pred_check_branch
      %46 = sbr.rel (0) target = $region29
    $region28: #{classblock_forward.1} parent=1 // pred_region
      %47 = dma.done [#allocation5], 4096
    $region29: #{classblock_forward.1} parent=1 // pred_fallthru
      _
    %v49 = vld [vmem:[%s0] sm:$0xff]
    %v50 = vld [vmem:[%s0 + $0x8] sm:$0xff]
    %v51 = vld [vmem:[%s0 + $0x10] sm:$0xff]
    %v52 = vld [vmem:[%s0 + $0x18] sm:$0xff]
    %v53 = vld [vmem:[%s0 + $0x20] sm:$0xff]
    %v54 = vld [vmem:[%s0 + $0x28] sm:$0xff]
    %v55 = vld [vmem:[%s0 + $0x30] sm:$0xff]
    %v56 = vld [vmem:[%s0 + $0x38] sm:$0xff]
    %v57 = vpack.c.bf16 %v49, %v49
    %v58 = vpack.c.bf16 %v50, %v50
    %v59 = vpack.c.bf16 %v51, %v51
    %v60 = vpack.c.bf16 %v52, %v52
    %v61 = vpack.c.bf16 %v53, %v53
    %v62 = vpack.c.bf16 %v54, %v54
    %v63 = vpack.c.bf16 %v55, %v55
    %v64 = vpack.c.bf16 %v56, %v56
    %v65 = vld [vmem:[#allocation2] sm:$0xff]
    %v66 = vld [vmem:[#allocation2 + $0x8] sm:$0xff]
    %v67 = vld [vmem:[#allocation2 + $0x10] sm:$0xff]
    %v68 = vld [vmem:[#allocation2 + $0x18] sm:$0xff]
    %v69 = vld [vmem:[#allocation2 + $0x20] sm:$0xff]
    %v70 = vld [vmem:[#allocation2 + $0x28] sm:$0xff]
    %v71 = vld [vmem:[#allocation2 + $0x30] sm:$0xff]
    %v72 = vld [vmem:[#allocation2 + $0x38] sm:$0xff]
    %v73 = vld [vmem:[#allocation2 + $0x40] sm:$0xff]
    %v74 = vld [vmem:[#allocation2 + $0x48] sm:$0xff]
    %v75 = vld [vmem:[#allocation2 + $0x50] sm:$0xff]
    %v76 = vld [vmem:[#allocation2 + $0x58] sm:$0xff]
    %v77 = vld [vmem:[#allocation2 + $0x60] sm:$0xff]
    %v78 = vld [vmem:[#allocation2 + $0x68] sm:$0xff]
    %v79 = vld [vmem:[#allocation2 + $0x70] sm:$0xff]
    %v80 = vld [vmem:[#allocation2 + $0x78] sm:$0xff]
    %v81 = vld [vmem:[#allocation2 + $0x80] sm:$0xff]
    %v82 = vld [vmem:[#allocation2 + $0x88] sm:$0xff]
    %v83 = vld [vmem:[#allocation2 + $0x90] sm:$0xff]
    %v84 = vld [vmem:[#allocation2 + $0x98] sm:$0xff]
    %v85 = vld [vmem:[#allocation2 + $0xa0] sm:$0xff]
    %v86 = vld [vmem:[#allocation2 + $0xa8] sm:$0xff]
    %v87 = vld [vmem:[#allocation2 + $0xb0] sm:$0xff]
    %v88 = vld [vmem:[#allocation2 + $0xb8] sm:$0xff]
    %v89 = vld [vmem:[#allocation2 + $0xc0] sm:$0xff]
    %v90 = vld [vmem:[#allocation2 + $0xc8] sm:$0xff]
    %v91 = vld [vmem:[#allocation2 + $0xd0] sm:$0xff]
    %v92 = vld [vmem:[#allocation2 + $0xd8] sm:$0xff]
    %v93 = vld [vmem:[#allocation2 + $0xe0] sm:$0xff]
    %v94 = vld [vmem:[#allocation2 + $0xe8] sm:$0xff]
    %v95 = vld [vmem:[#allocation2 + $0xf0] sm:$0xff]
    %v96 = vld [vmem:[#allocation2 + $0xf8] sm:$0xff]
    %v97 = vld [vmem:[#allocation2 + $0x100] sm:$0xff]
    %v98 = vld [vmem:[#allocation2 + $0x108] sm:$0xff]
    %v99 = vld [vmem:[#allocation2 + $0x110] sm:$0xff]
    %v100 = vld [vmem:[#allocation2 + $0x118] sm:$0xff]
    %v101 = vld [vmem:[#allocation2 + $0x120] sm:$0xff]
    %v102 = vld [vmem:[#allocation2 + $0x128] sm:$0xff]
    %v103 = vld [vmem:[#allocation2 + $0x130] sm:$0xff]
    %v104 = vld [vmem:[#allocation2 + $0x138] sm:$0xff]
    %v105 = vld [vmem:[#allocation2 + $0x140] sm:$0xff]
    %v106 = vld [vmem:[#allocation2 + $0x148] sm:$0xff]
    %v107 = vld [vmem:[#allocation2 + $0x150] sm:$0xff]
    %v108 = vld [vmem:[#allocation2 + $0x158] sm:$0xff]
    %v109 = vld [vmem:[#allocation2 + $0x160] sm:$0xff]
    %v110 = vld [vmem:[#allocation2 + $0x168] sm:$0xff]
    %v111 = vld [vmem:[#allocation2 + $0x170] sm:$0xff]
    %v112 = vld [vmem:[#allocation2 + $0x178] sm:$0xff]
    %v113 = vld [vmem:[#allocation2 + $0x180] sm:$0xff]
    %v114 = vld [vmem:[#allocation2 + $0x188] sm:$0xff]
    %v115 = vld [vmem:[#allocation2 + $0x190] sm:$0xff]
    %v116 = vld [vmem:[#allocation2 + $0x198] sm:$0xff]
    %v117 = vld [vmem:[#allocation2 + $0x1a0] sm:$0xff]
    %v118 = vld [vmem:[#allocation2 + $0x1a8] sm:$0xff]
    %v119 = vld [vmem:[#allocation2 + $0x1b0] sm:$0xff]
    %v120 = vld [vmem:[#allocation2 + $0x1b8] sm:$0xff]
    %v121 = vld [vmem:[#allocation2 + $0x1c0] sm:$0xff]
    %v122 = vld [vmem:[#allocation2 + $0x1c8] sm:$0xff]
    %v123 = vld [vmem:[#allocation2 + $0x1d0] sm:$0xff]
    %v124 = vld [vmem:[#allocation2 + $0x1d8] sm:$0xff]
    %v125 = vld [vmem:[#allocation2 + $0x1e0] sm:$0xff]
    %v126 = vld [vmem:[#allocation2 + $0x1e8] sm:$0xff]
    %v127 = vld [vmem:[#allocation2 + $0x1f0] sm:$0xff]
    %v128 = vld [vmem:[#allocation2 + $0x1f8] sm:$0xff]
    %v129 = vld [vmem:[#allocation2 + $0x200] sm:$0xff]
    %v130 = vld [vmem:[#allocation2 + $0x208] sm:$0xff]
    %v131 = vld [vmem:[#allocation2 + $0x210] sm:$0xff]
    %v132 = vld [vmem:[#allocation2 + $0x218] sm:$0xff]
    %v133 = vld [vmem:[#allocation2 + $0x220] sm:$0xff]
    %v134 = vld [vmem:[#allocation2 + $0x228] sm:$0xff]
    %v135 = vld [vmem:[#allocation2 + $0x230] sm:$0xff]
    %v136 = vld [vmem:[#allocation2 + $0x238] sm:$0xff]
    %v137 = vld [vmem:[#allocation2 + $0x240] sm:$0xff]
    %v138 = vld [vmem:[#allocation2 + $0x248] sm:$0xff]
    %v139 = vld [vmem:[#allocation2 + $0x250] sm:$0xff]
    %v140 = vld [vmem:[#allocation2 + $0x258] sm:$0xff]
    %v141 = vld [vmem:[#allocation2 + $0x260] sm:$0xff]
    %v142 = vld [vmem:[#allocation2 + $0x268] sm:$0xff]
    %v143 = vld [vmem:[#allocation2 + $0x270] sm:$0xff]
    %v144 = vld [vmem:[#allocation2 + $0x278] sm:$0xff]
    %v145 = vld [vmem:[#allocation2 + $0x280] sm:$0xff]
    %v146 = vld [vmem:[#allocation2 + $0x288] sm:$0xff]
    %v147 = vld [vmem:[#allocation2 + $0x290] sm:$0xff]
    %v148 = vld [vmem:[#allocation2 + $0x298] sm:$0xff]
    %v149 = vld [vmem:[#allocation2 + $0x2a0] sm:$0xff]
    %v150 = vld [vmem:[#allocation2 + $0x2a8] sm:$0xff]
    %v151 = vld [vmem:[#allocation2 + $0x2b0] sm:$0xff]
    %v152 = vld [vmem:[#allocation2 + $0x2b8] sm:$0xff]
    %v153 = vld [vmem:[#allocation2 + $0x2c0] sm:$0xff]
    %v154 = vld [vmem:[#allocation2 + $0x2c8] sm:$0xff]
    %v155 = vld [vmem:[#allocation2 + $0x2d0] sm:$0xff]
    %v156 = vld [vmem:[#allocation2 + $0x2d8] sm:$0xff]
    %v157 = vld [vmem:[#allocation2 + $0x2e0] sm:$0xff]
    %v158 = vld [vmem:[#allocation2 + $0x2e8] sm:$0xff]
    %v159 = vld [vmem:[#allocation2 + $0x2f0] sm:$0xff]
    %v160 = vld [vmem:[#allocation2 + $0x2f8] sm:$0xff]
    %v161 = vld [vmem:[#allocation2 + $0x300] sm:$0xff]
    %v162 = vld [vmem:[#allocation2 + $0x308] sm:$0xff]
    %v163 = vld [vmem:[#allocation2 + $0x310] sm:$0xff]
    %v164 = vld [vmem:[#allocation2 + $0x318] sm:$0xff]
    %v165 = vld [vmem:[#allocation2 + $0x320] sm:$0xff]
    %v166 = vld [vmem:[#allocation2 + $0x328] sm:$0xff]
    %v167 = vld [vmem:[#allocation2 + $0x330] sm:$0xff]
    %v168 = vld [vmem:[#allocation2 + $0x338] sm:$0xff]
    %v169 = vld [vmem:[#allocation2 + $0x340] sm:$0xff]
    %v170 = vld [vmem:[#allocation2 + $0x348] sm:$0xff]
    %v171 = vld [vmem:[#allocation2 + $0x350] sm:$0xff]
    %v172 = vld [vmem:[#allocation2 + $0x358] sm:$0xff]
    %v173 = vld [vmem:[#allocation2 + $0x360] sm:$0xff]
    %v174 = vld [vmem:[#allocation2 + $0x368] sm:$0xff]
    %v175 = vld [vmem:[#allocation2 + $0x370] sm:$0xff]
    %v176 = vld [vmem:[#allocation2 + $0x378] sm:$0xff]
    %v177 = vld [vmem:[#allocation2 + $0x380] sm:$0xff]
    %v178 = vld [vmem:[#allocation2 + $0x388] sm:$0xff]
    %v179 = vld [vmem:[#allocation2 + $0x390] sm:$0xff]
    %v180 = vld [vmem:[#allocation2 + $0x398] sm:$0xff]
    %v181 = vld [vmem:[#allocation2 + $0x3a0] sm:$0xff]
    %v182 = vld [vmem:[#allocation2 + $0x3a8] sm:$0xff]
    %v183 = vld [vmem:[#allocation2 + $0x3b0] sm:$0xff]
    %v184 = vld [vmem:[#allocation2 + $0x3b8] sm:$0xff]
    %v185 = vld [vmem:[#allocation2 + $0x3c0] sm:$0xff]
    %v186 = vld [vmem:[#allocation2 + $0x3c8] sm:$0xff]
    %v187 = vld [vmem:[#allocation2 + $0x3d0] sm:$0xff]
    %v188 = vld [vmem:[#allocation2 + $0x3d8] sm:$0xff]
    %v189 = vld [vmem:[#allocation2 + $0x3e0] sm:$0xff]
    %v190 = vld [vmem:[#allocation2 + $0x3e8] sm:$0xff]
    %v191 = vld [vmem:[#allocation2 + $0x3f0] sm:$0xff]
    %v192 = vld [vmem:[#allocation2 + $0x3f8] sm:$0xff]
    %v193 = vld [vmem:[#allocation2 + $0x400] sm:$0xff]
    %v194 = vld [vmem:[#allocation2 + $0x408] sm:$0xff]
    %v195 = vld [vmem:[#allocation2 + $0x410] sm:$0xff]
    %v196 = vld [vmem:[#allocation2 + $0x418] sm:$0xff]
    %v197 = vld [vmem:[#allocation2 + $0x420] sm:$0xff]
    %v198 = vld [vmem:[#allocation2 + $0x428] sm:$0xff]
    %v199 = vld [vmem:[#allocation2 + $0x430] sm:$0xff]
    %v200 = vld [vmem:[#allocation2 + $0x438] sm:$0xff]
    %v201 = vld [vmem:[#allocation2 + $0x440] sm:$0xff]
    %v202 = vld [vmem:[#allocation2 + $0x448] sm:$0xff]
    %v203 = vld [vmem:[#allocation2 + $0x450] sm:$0xff]
    %v204 = vld [vmem:[#allocation2 + $0x458] sm:$0xff]
    %v205 = vld [vmem:[#allocation2 + $0x460] sm:$0xff]
    %v206 = vld [vmem:[#allocation2 + $0x468] sm:$0xff]
    %v207 = vld [vmem:[#allocation2 + $0x470] sm:$0xff]
    %v208 = vld [vmem:[#allocation2 + $0x478] sm:$0xff]
    %v209 = vld [vmem:[#allocation2 + $0x480] sm:$0xff]
    %v210 = vld [vmem:[#allocation2 + $0x488] sm:$0xff]
    %v211 = vld [vmem:[#allocation2 + $0x490] sm:$0xff]
    %v212 = vld [vmem:[#allocation2 + $0x498] sm:$0xff]
    %v213 = vld [vmem:[#allocation2 + $0x4a0] sm:$0xff]
    %v214 = vld [vmem:[#allocation2 + $0x4a8] sm:$0xff]
    %v215 = vld [vmem:[#allocation2 + $0x4b0] sm:$0xff]
    %v216 = vld [vmem:[#allocation2 + $0x4b8] sm:$0xff]
    %v217 = vld [vmem:[#allocation2 + $0x4c0] sm:$0xff]
    %v218 = vld [vmem:[#allocation2 + $0x4c8] sm:$0xff]
    %v219 = vld [vmem:[#allocation2 + $0x4d0] sm:$0xff]
    %v220 = vld [vmem:[#allocation2 + $0x4d8] sm:$0xff]
    %v221 = vld [vmem:[#allocation2 + $0x4e0] sm:$0xff]
    %v222 = vld [vmem:[#allocation2 + $0x4e8] sm:$0xff]
    %v223 = vld [vmem:[#allocation2 + $0x4f0] sm:$0xff]
    %v224 = vld [vmem:[#allocation2 + $0x4f8] sm:$0xff]
    %v225 = vld [vmem:[#allocation2 + $0x500] sm:$0xff]
    %v226 = vld [vmem:[#allocation2 + $0x508] sm:$0xff]
    %v227 = vld [vmem:[#allocation2 + $0x510] sm:$0xff]
    %v228 = vld [vmem:[#allocation2 + $0x518] sm:$0xff]
    %v229 = vld [vmem:[#allocation2 + $0x520] sm:$0xff]
    %v230 = vld [vmem:[#allocation2 + $0x528] sm:$0xff]
    %v231 = vld [vmem:[#allocation2 + $0x530] sm:$0xff]
    %v232 = vld [vmem:[#allocation2 + $0x538] sm:$0xff]
    %v233 = vld [vmem:[#allocation2 + $0x540] sm:$0xff]
    %v234 = vld [vmem:[#allocation2 + $0x548] sm:$0xff]
    %v235 = vld [vmem:[#allocation2 + $0x550] sm:$0xff]
    %v236 = vld [vmem:[#allocation2 + $0x558] sm:$0xff]
    %v237 = vld [vmem:[#allocation2 + $0x560] sm:$0xff]
    %v238 = vld [vmem:[#allocation2 + $0x568] sm:$0xff]
    %v239 = vld [vmem:[#allocation2 + $0x570] sm:$0xff]
    %v240 = vld [vmem:[#allocation2 + $0x578] sm:$0xff]
    %v241 = vld [vmem:[#allocation2 + $0x580] sm:$0xff]
    %v242 = vld [vmem:[#allocation2 + $0x588] sm:$0xff]
    %v243 = vld [vmem:[#allocation2 + $0x590] sm:$0xff]
    %v244 = vld [vmem:[#allocation2 + $0x598] sm:$0xff]
    %v245 = vld [vmem:[#allocation2 + $0x5a0] sm:$0xff]
    %v246 = vld [vmem:[#allocation2 + $0x5a8] sm:$0xff]
    %v247 = vld [vmem:[#allocation2 + $0x5b0] sm:$0xff]
    %v248 = vld [vmem:[#allocation2 + $0x5b8] sm:$0xff]
    %v249 = vld [vmem:[#allocation2 + $0x5c0] sm:$0xff]
    %v250 = vld [vmem:[#allocation2 + $0x5c8] sm:$0xff]
    %v251 = vld [vmem:[#allocation2 + $0x5d0] sm:$0xff]
    %v252 = vld [vmem:[#allocation2 + $0x5d8] sm:$0xff]
    %v253 = vld [vmem:[#allocation2 + $0x5e0] sm:$0xff]
    %v254 = vld [vmem:[#allocation2 + $0x5e8] sm:$0xff]
    %v255 = vld [vmem:[#allocation2 + $0x5f0] sm:$0xff]
    %v256 = vld [vmem:[#allocation2 + $0x5f8] sm:$0xff]
    %v257 = vld [vmem:[#allocation2 + $0x600] sm:$0xff]
    %v258 = vld [vmem:[#allocation2 + $0x608] sm:$0xff]
    %v259 = vld [vmem:[#allocation2 + $0x610] sm:$0xff]
    %v260 = vld [vmem:[#allocation2 + $0x618] sm:$0xff]
    %v261 = vld [vmem:[#allocation2 + $0x620] sm:$0xff]
    %v262 = vld [vmem:[#allocation2 + $0x628] sm:$0xff]
    %v263 = vld [vmem:[#allocation2 + $0x630] sm:$0xff]
    %v264 = vld [vmem:[#allocation2 + $0x638] sm:$0xff]
    %v265 = vld [vmem:[#allocation2 + $0x640] sm:$0xff]
    %v266 = vld [vmem:[#allocation2 + $0x648] sm:$0xff]
    %v267 = vld [vmem:[#allocation2 + $0x650] sm:$0xff]
    %v268 = vld [vmem:[#allocation2 + $0x658] sm:$0xff]
    %v269 = vld [vmem:[#allocation2 + $0x660] sm:$0xff]
    %v270 = vld [vmem:[#allocation2 + $0x668] sm:$0xff]
    %v271 = vld [vmem:[#allocation2 + $0x670] sm:$0xff]
    %v272 = vld [vmem:[#allocation2 + $0x678] sm:$0xff]
    %v273 = vld [vmem:[#allocation2 + $0x680] sm:$0xff]
    %v274 = vld [vmem:[#allocation2 + $0x688] sm:$0xff]
    %v275 = vld [vmem:[#allocation2 + $0x690] sm:$0xff]
    %v276 = vld [vmem:[#allocation2 + $0x698] sm:$0xff]
    %v277 = vld [vmem:[#allocation2 + $0x6a0] sm:$0xff]
    %v278 = vld [vmem:[#allocation2 + $0x6a8] sm:$0xff]
    %v279 = vld [vmem:[#allocation2 + $0x6b0] sm:$0xff]
    %v280 = vld [vmem:[#allocation2 + $0x6b8] sm:$0xff]
    %v281 = vld [vmem:[#allocation2 + $0x6c0] sm:$0xff]
    %v282 = vld [vmem:[#allocation2 + $0x6c8] sm:$0xff]
    %v283 = vld [vmem:[#allocation2 + $0x6d0] sm:$0xff]
    %v284 = vld [vmem:[#allocation2 + $0x6d8] sm:$0xff]
    %v285 = vld [vmem:[#allocation2 + $0x6e0] sm:$0xff]
    %v286 = vld [vmem:[#allocation2 + $0x6e8] sm:$0xff]
    %v287 = vld [vmem:[#allocation2 + $0x6f0] sm:$0xff]
    %v288 = vld [vmem:[#allocation2 + $0x6f8] sm:$0xff]
    %v289 = vld [vmem:[#allocation2 + $0x700] sm:$0xff]
    %v290 = vld [vmem:[#allocation2 + $0x708] sm:$0xff]
    %v291 = vld [vmem:[#allocation2 + $0x710] sm:$0xff]
    %v292 = vld [vmem:[#allocation2 + $0x718] sm:$0xff]
    %v293 = vld [vmem:[#allocation2 + $0x720] sm:$0xff]
    %v294 = vld [vmem:[#allocation2 + $0x728] sm:$0xff]
    %v295 = vld [vmem:[#allocation2 + $0x730] sm:$0xff]
    %v296 = vld [vmem:[#allocation2 + $0x738] sm:$0xff]
    %v297 = vld [vmem:[#allocation2 + $0x740] sm:$0xff]
    %v298 = vld [vmem:[#allocation2 + $0x748] sm:$0xff]
    %v299 = vld [vmem:[#allocation2 + $0x750] sm:$0xff]
    %v300 = vld [vmem:[#allocation2 + $0x758] sm:$0xff]
    %v301 = vld [vmem:[#allocation2 + $0x760] sm:$0xff]
    %v302 = vld [vmem:[#allocation2 + $0x768] sm:$0xff]
    %v303 = vld [vmem:[#allocation2 + $0x770] sm:$0xff]
    %v304 = vld [vmem:[#allocation2 + $0x778] sm:$0xff]
    %v305 = vld [vmem:[#allocation2 + $0x780] sm:$0xff]
    %v306 = vld [vmem:[#allocation2 + $0x788] sm:$0xff]
    %v307 = vld [vmem:[#allocation2 + $0x790] sm:$0xff]
    %v308 = vld [vmem:[#allocation2 + $0x798] sm:$0xff]
    %v309 = vld [vmem:[#allocation2 + $0x7a0] sm:$0xff]
    %v310 = vld [vmem:[#allocation2 + $0x7a8] sm:$0xff]
    %v311 = vld [vmem:[#allocation2 + $0x7b0] sm:$0xff]
    %v312 = vld [vmem:[#allocation2 + $0x7b8] sm:$0xff]
    %v313 = vld [vmem:[#allocation2 + $0x7c0] sm:$0xff]
    %v314 = vld [vmem:[#allocation2 + $0x7c8] sm:$0xff]
    %v315 = vld [vmem:[#allocation2 + $0x7d0] sm:$0xff]
    %v316 = vld [vmem:[#allocation2 + $0x7d8] sm:$0xff]
    %v317 = vld [vmem:[#allocation2 + $0x7e0] sm:$0xff]
    %v318 = vld [vmem:[#allocation2 + $0x7e8] sm:$0xff]
    %v319 = vld [vmem:[#allocation2 + $0x7f0] sm:$0xff]
    %v320 = vld [vmem:[#allocation2 + $0x7f8] sm:$0xff]
    %v321 = vld [vmem:[%s2] sm:$0xf]
    %v323 = vlaneseq
    %v324 = vshrl.u32 %v323, 7
    %v325 = vsub.s32 0, %v324
    %v326 = vrot.slane %v321, %v325
    %v327 = vlaneseq
    %v328 = vshrl.u32 %v327, 7
    %v329 = vsub.s32 1, %v328
    %v330 = vrot.slane %v321, %v329
    %v331 = vlaneseq
    %v332 = vshrl.u32 %v331, 7
    %v333 = vsub.s32 2, %v332
    %v334 = vrot.slane %v321, %v333
    %v335 = vlaneseq
    %v336 = vshrl.u32 %v335, 7
    %v337 = vsub.s32 3, %v336
    %v338 = vrot.slane %v321, %v337
    %v599 = vunpack.c.l.b16 %v65
    %v600 = vunpack.c.h.b16 %v65
    %v601 = vunpack.c.l.b16 %v66
    %v602 = vunpack.c.h.b16 %v66
    %v603 = vunpack.c.l.b16 %v67
    %v604 = vunpack.c.h.b16 %v67
    %v605 = vunpack.c.l.b16 %v68
    %v606 = vunpack.c.h.b16 %v68
    %v607 = vunpack.c.l.b16 %v69
    %v608 = vunpack.c.h.b16 %v69
    %v609 = vunpack.c.l.b16 %v70
    %v610 = vunpack.c.h.b16 %v70
    %v611 = vunpack.c.l.b16 %v71
    %v612 = vunpack.c.h.b16 %v71
    %v613 = vunpack.c.l.b16 %v72
    %v614 = vunpack.c.h.b16 %v72
    %v615 = vunpack.c.l.b16 %v73
    %v616 = vunpack.c.h.b16 %v73
    %v617 = vunpack.c.l.b16 %v74
    %v618 = vunpack.c.h.b16 %v74
    %v619 = vunpack.c.l.b16 %v75
    %v620 = vunpack.c.h.b16 %v75
    %v621 = vunpack.c.l.b16 %v76
    %v622 = vunpack.c.h.b16 %v76
    %v623 = vunpack.c.l.b16 %v77
    %v624 = vunpack.c.h.b16 %v77
    %v625 = vunpack.c.l.b16 %v78
    %v626 = vunpack.c.h.b16 %v78
    %v627 = vunpack.c.l.b16 %v79
    %v628 = vunpack.c.h.b16 %v79
    %v629 = vunpack.c.l.b16 %v80
    %v630 = vunpack.c.h.b16 %v80
    %v631 = vunpack.c.l.b16 %v81
    %v632 = vunpack.c.h.b16 %v81
    %v633 = vunpack.c.l.b16 %v82
    %v634 = vunpack.c.h.b16 %v82
    %v635 = vunpack.c.l.b16 %v83
    %v636 = vunpack.c.h.b16 %v83
    %v637 = vunpack.c.l.b16 %v84
    %v638 = vunpack.c.h.b16 %v84
    %v639 = vunpack.c.l.b16 %v85
    %v640 = vunpack.c.h.b16 %v85
    %v641 = vunpack.c.l.b16 %v86
    %v642 = vunpack.c.h.b16 %v86
    %v643 = vunpack.c.l.b16 %v87
    %v644 = vunpack.c.h.b16 %v87
    %v645 = vunpack.c.l.b16 %v88
    %v646 = vunpack.c.h.b16 %v88
    %v647 = vunpack.c.l.b16 %v89
    %v648 = vunpack.c.h.b16 %v89
    %v649 = vunpack.c.l.b16 %v90
    %v650 = vunpack.c.h.b16 %v90
    %v651 = vunpack.c.l.b16 %v91
    %v652 = vunpack.c.h.b16 %v91
    %v653 = vunpack.c.l.b16 %v92
    %v654 = vunpack.c.h.b16 %v92
    %v655 = vunpack.c.l.b16 %v93
    %v656 = vunpack.c.h.b16 %v93
    %v657 = vunpack.c.l.b16 %v94
    %v658 = vunpack.c.h.b16 %v94
    %v659 = vunpack.c.l.b16 %v95
    %v660 = vunpack.c.h.b16 %v95
    %v661 = vunpack.c.l.b16 %v96
    %v662 = vunpack.c.h.b16 %v96
    %v663 = vunpack.c.l.b16 %v97
    %v664 = vunpack.c.h.b16 %v97
    %v665 = vunpack.c.l.b16 %v98
    %v666 = vunpack.c.h.b16 %v98
    %v667 = vunpack.c.l.b16 %v99
    %v668 = vunpack.c.h.b16 %v99
    %v669 = vunpack.c.l.b16 %v100
    %v670 = vunpack.c.h.b16 %v100
    %v671 = vunpack.c.l.b16 %v101
    %v672 = vunpack.c.h.b16 %v101
    %v673 = vunpack.c.l.b16 %v102
    %v674 = vunpack.c.h.b16 %v102
    %v675 = vunpack.c.l.b16 %v103
    %v676 = vunpack.c.h.b16 %v103
    %v677 = vunpack.c.l.b16 %v104
    %v678 = vunpack.c.h.b16 %v104
    %v679 = vunpack.c.l.b16 %v105
    %v680 = vunpack.c.h.b16 %v105
    %v681 = vunpack.c.l.b16 %v106
    %v682 = vunpack.c.h.b16 %v106
    %v683 = vunpack.c.l.b16 %v107
    %v684 = vunpack.c.h.b16 %v107
    %v685 = vunpack.c.l.b16 %v108
    %v686 = vunpack.c.h.b16 %v108
    %v687 = vunpack.c.l.b16 %v109
    %v688 = vunpack.c.h.b16 %v109
    %v689 = vunpack.c.l.b16 %v110
    %v690 = vunpack.c.h.b16 %v110
    %v691 = vunpack.c.l.b16 %v111
    %v692 = vunpack.c.h.b16 %v111
    %v693 = vunpack.c.l.b16 %v112
    %v694 = vunpack.c.h.b16 %v112
    %v695 = vunpack.c.l.b16 %v113
    %v696 = vunpack.c.h.b16 %v113
    %v697 = vunpack.c.l.b16 %v114
    %v698 = vunpack.c.h.b16 %v114
    %v699 = vunpack.c.l.b16 %v115
    %v700 = vunpack.c.h.b16 %v115
    %v701 = vunpack.c.l.b16 %v116
    %v702 = vunpack.c.h.b16 %v116
    %v703 = vunpack.c.l.b16 %v117
    %v704 = vunpack.c.h.b16 %v117
    %v705 = vunpack.c.l.b16 %v118
    %v706 = vunpack.c.h.b16 %v118
    %v707 = vunpack.c.l.b16 %v119
    %v708 = vunpack.c.h.b16 %v119
    %v709 = vunpack.c.l.b16 %v120
    %v710 = vunpack.c.h.b16 %v120
    %v711 = vunpack.c.l.b16 %v121
    %v712 = vunpack.c.h.b16 %v121
    %v713 = vunpack.c.l.b16 %v122
    %v714 = vunpack.c.h.b16 %v122
    %v715 = vunpack.c.l.b16 %v123
    %v716 = vunpack.c.h.b16 %v123
    %v717 = vunpack.c.l.b16 %v124
    %v718 = vunpack.c.h.b16 %v124
    %v719 = vunpack.c.l.b16 %v125
    %v720 = vunpack.c.h.b16 %v125
    %v721 = vunpack.c.l.b16 %v126
    %v722 = vunpack.c.h.b16 %v126
    %v723 = vunpack.c.l.b16 %v127
    %v724 = vunpack.c.h.b16 %v127
    %v725 = vunpack.c.l.b16 %v128
    %v726 = vunpack.c.h.b16 %v128
    %v727 = vunpack.c.l.b16 %v129
    %v728 = vunpack.c.h.b16 %v129
    %v729 = vunpack.c.l.b16 %v130
    %v730 = vunpack.c.h.b16 %v130
    %v731 = vunpack.c.l.b16 %v131
    %v732 = vunpack.c.h.b16 %v131
    %v733 = vunpack.c.l.b16 %v132
    %v734 = vunpack.c.h.b16 %v132
    %v735 = vunpack.c.l.b16 %v133
    %v736 = vunpack.c.h.b16 %v133
    %v737 = vunpack.c.l.b16 %v134
    %v738 = vunpack.c.h.b16 %v134
    %v739 = vunpack.c.l.b16 %v135
    %v740 = vunpack.c.h.b16 %v135
    %v741 = vunpack.c.l.b16 %v136
    %v742 = vunpack.c.h.b16 %v136
    %v743 = vunpack.c.l.b16 %v137
    %v744 = vunpack.c.h.b16 %v137
    %v745 = vunpack.c.l.b16 %v138
    %v746 = vunpack.c.h.b16 %v138
    %v747 = vunpack.c.l.b16 %v139
    %v748 = vunpack.c.h.b16 %v139
    %v749 = vunpack.c.l.b16 %v140
    %v750 = vunpack.c.h.b16 %v140
    %v751 = vunpack.c.l.b16 %v141
    %v752 = vunpack.c.h.b16 %v141
    %v753 = vunpack.c.l.b16 %v142
    %v754 = vunpack.c.h.b16 %v142
    %v755 = vunpack.c.l.b16 %v143
    %v756 = vunpack.c.h.b16 %v143
    %v757 = vunpack.c.l.b16 %v144
    %v758 = vunpack.c.h.b16 %v144
    %v759 = vunpack.c.l.b16 %v145
    %v760 = vunpack.c.h.b16 %v145
    %v761 = vunpack.c.l.b16 %v146
    %v762 = vunpack.c.h.b16 %v146
    %v763 = vunpack.c.l.b16 %v147
    %v764 = vunpack.c.h.b16 %v147
    %v765 = vunpack.c.l.b16 %v148
    %v766 = vunpack.c.h.b16 %v148
    %v767 = vunpack.c.l.b16 %v149
    %v768 = vunpack.c.h.b16 %v149
    %v769 = vunpack.c.l.b16 %v150
    %v770 = vunpack.c.h.b16 %v150
    %v771 = vunpack.c.l.b16 %v151
    %v772 = vunpack.c.h.b16 %v151
    %v773 = vunpack.c.l.b16 %v152
    %v774 = vunpack.c.h.b16 %v152
    %v775 = vunpack.c.l.b16 %v153
    %v776 = vunpack.c.h.b16 %v153
    %v777 = vunpack.c.l.b16 %v154
    %v778 = vunpack.c.h.b16 %v154
    %v779 = vunpack.c.l.b16 %v155
    %v780 = vunpack.c.h.b16 %v155
    %v781 = vunpack.c.l.b16 %v156
    %v782 = vunpack.c.h.b16 %v156
    %v783 = vunpack.c.l.b16 %v157
    %v784 = vunpack.c.h.b16 %v157
    %v785 = vunpack.c.l.b16 %v158
    %v786 = vunpack.c.h.b16 %v158
    %v787 = vunpack.c.l.b16 %v159
    %v788 = vunpack.c.h.b16 %v159
    %v789 = vunpack.c.l.b16 %v160
    %v790 = vunpack.c.h.b16 %v160
    %v791 = vunpack.c.l.b16 %v161
    %v792 = vunpack.c.h.b16 %v161
    %v793 = vunpack.c.l.b16 %v162
    %v794 = vunpack.c.h.b16 %v162
    %v795 = vunpack.c.l.b16 %v163
    %v796 = vunpack.c.h.b16 %v163
    %v797 = vunpack.c.l.b16 %v164
    %v798 = vunpack.c.h.b16 %v164
    %v799 = vunpack.c.l.b16 %v165
    %v800 = vunpack.c.h.b16 %v165
    %v801 = vunpack.c.l.b16 %v166
    %v802 = vunpack.c.h.b16 %v166
    %v803 = vunpack.c.l.b16 %v167
    %v804 = vunpack.c.h.b16 %v167
    %v805 = vunpack.c.l.b16 %v168
    %v806 = vunpack.c.h.b16 %v168
    %v807 = vunpack.c.l.b16 %v169
    %v808 = vunpack.c.h.b16 %v169
    %v809 = vunpack.c.l.b16 %v170
    %v810 = vunpack.c.h.b16 %v170
    %v811 = vunpack.c.l.b16 %v171
    %v812 = vunpack.c.h.b16 %v171
    %v813 = vunpack.c.l.b16 %v172
    %v814 = vunpack.c.h.b16 %v172
    %v815 = vunpack.c.l.b16 %v173
    %v816 = vunpack.c.h.b16 %v173
    %v817 = vunpack.c.l.b16 %v174
    %v818 = vunpack.c.h.b16 %v174
    %v819 = vunpack.c.l.b16 %v175
    %v820 = vunpack.c.h.b16 %v175
    %v821 = vunpack.c.l.b16 %v176
    %v822 = vunpack.c.h.b16 %v176
    %v823 = vunpack.c.l.b16 %v177
    %v824 = vunpack.c.h.b16 %v177
    %v825 = vunpack.c.l.b16 %v178
    %v826 = vunpack.c.h.b16 %v178
    %v827 = vunpack.c.l.b16 %v179
    %v828 = vunpack.c.h.b16 %v179
    %v829 = vunpack.c.l.b16 %v180
    %v830 = vunpack.c.h.b16 %v180
    %v831 = vunpack.c.l.b16 %v181
    %v832 = vunpack.c.h.b16 %v181
    %v833 = vunpack.c.l.b16 %v182
    %v834 = vunpack.c.h.b16 %v182
    %v835 = vunpack.c.l.b16 %v183
    %v836 = vunpack.c.h.b16 %v183
    %v837 = vunpack.c.l.b16 %v184
    %v838 = vunpack.c.h.b16 %v184
    %v839 = vunpack.c.l.b16 %v185
    %v840 = vunpack.c.h.b16 %v185
    %v841 = vunpack.c.l.b16 %v186
    %v842 = vunpack.c.h.b16 %v186
    %v843 = vunpack.c.l.b16 %v187
    %v844 = vunpack.c.h.b16 %v187
    %v845 = vunpack.c.l.b16 %v188
    %v846 = vunpack.c.h.b16 %v188
    %v847 = vunpack.c.l.b16 %v189
    %v848 = vunpack.c.h.b16 %v189
    %v849 = vunpack.c.l.b16 %v190
    %v850 = vunpack.c.h.b16 %v190
    %v851 = vunpack.c.l.b16 %v191
    %v852 = vunpack.c.h.b16 %v191
    %v853 = vunpack.c.l.b16 %v192
    %v854 = vunpack.c.h.b16 %v192
    %v855 = vunpack.c.l.b16 %v193
    %v856 = vunpack.c.h.b16 %v193
    %v857 = vunpack.c.l.b16 %v194
    %v858 = vunpack.c.h.b16 %v194
    %v859 = vunpack.c.l.b16 %v195
    %v860 = vunpack.c.h.b16 %v195
    %v861 = vunpack.c.l.b16 %v196
    %v862 = vunpack.c.h.b16 %v196
    %v863 = vunpack.c.l.b16 %v197
    %v864 = vunpack.c.h.b16 %v197
    %v865 = vunpack.c.l.b16 %v198
    %v866 = vunpack.c.h.b16 %v198
    %v867 = vunpack.c.l.b16 %v199
    %v868 = vunpack.c.h.b16 %v199
    %v869 = vunpack.c.l.b16 %v200
    %v870 = vunpack.c.h.b16 %v200
    %v871 = vunpack.c.l.b16 %v201
    %v872 = vunpack.c.h.b16 %v201
    %v873 = vunpack.c.l.b16 %v202
    %v874 = vunpack.c.h.b16 %v202
    %v875 = vunpack.c.l.b16 %v203
    %v876 = vunpack.c.h.b16 %v203
    %v877 = vunpack.c.l.b16 %v204
    %v878 = vunpack.c.h.b16 %v204
    %v879 = vunpack.c.l.b16 %v205
    %v880 = vunpack.c.h.b16 %v205
    %v881 = vunpack.c.l.b16 %v206
    %v882 = vunpack.c.h.b16 %v206
    %v883 = vunpack.c.l.b16 %v207
    %v884 = vunpack.c.h.b16 %v207
    %v885 = vunpack.c.l.b16 %v208
    %v886 = vunpack.c.h.b16 %v208
    %v887 = vunpack.c.l.b16 %v209
    %v888 = vunpack.c.h.b16 %v209
    %v889 = vunpack.c.l.b16 %v210
    %v890 = vunpack.c.h.b16 %v210
    %v891 = vunpack.c.l.b16 %v211
    %v892 = vunpack.c.h.b16 %v211
    %v893 = vunpack.c.l.b16 %v212
    %v894 = vunpack.c.h.b16 %v212
    %v895 = vunpack.c.l.b16 %v213
    %v896 = vunpack.c.h.b16 %v213
    %v897 = vunpack.c.l.b16 %v214
    %v898 = vunpack.c.h.b16 %v214
    %v899 = vunpack.c.l.b16 %v215
    %v900 = vunpack.c.h.b16 %v215
    %v901 = vunpack.c.l.b16 %v216
    %v902 = vunpack.c.h.b16 %v216
    %v903 = vunpack.c.l.b16 %v217
    %v904 = vunpack.c.h.b16 %v217
    %v905 = vunpack.c.l.b16 %v218
    %v906 = vunpack.c.h.b16 %v218
    %v907 = vunpack.c.l.b16 %v219
    %v908 = vunpack.c.h.b16 %v219
    %v909 = vunpack.c.l.b16 %v220
    %v910 = vunpack.c.h.b16 %v220
    %v911 = vunpack.c.l.b16 %v221
    %v912 = vunpack.c.h.b16 %v221
    %v913 = vunpack.c.l.b16 %v222
    %v914 = vunpack.c.h.b16 %v222
    %v915 = vunpack.c.l.b16 %v223
    %v916 = vunpack.c.h.b16 %v223
    %v917 = vunpack.c.l.b16 %v224
    %v918 = vunpack.c.h.b16 %v224
    %v919 = vunpack.c.l.b16 %v225
    %v920 = vunpack.c.h.b16 %v225
    %v921 = vunpack.c.l.b16 %v226
    %v922 = vunpack.c.h.b16 %v226
    %v923 = vunpack.c.l.b16 %v227
    %v924 = vunpack.c.h.b16 %v227
    %v925 = vunpack.c.l.b16 %v228
    %v926 = vunpack.c.h.b16 %v228
    %v927 = vunpack.c.l.b16 %v229
    %v928 = vunpack.c.h.b16 %v229
    %v929 = vunpack.c.l.b16 %v230
    %v930 = vunpack.c.h.b16 %v230
    %v931 = vunpack.c.l.b16 %v231
    %v932 = vunpack.c.h.b16 %v231
    %v933 = vunpack.c.l.b16 %v232
    %v934 = vunpack.c.h.b16 %v232
    %v935 = vunpack.c.l.b16 %v233
    %v936 = vunpack.c.h.b16 %v233
    %v937 = vunpack.c.l.b16 %v234
    %v938 = vunpack.c.h.b16 %v234
    %v939 = vunpack.c.l.b16 %v235
    %v940 = vunpack.c.h.b16 %v235
    %v941 = vunpack.c.l.b16 %v236
    %v942 = vunpack.c.h.b16 %v236
    %v943 = vunpack.c.l.b16 %v237
    %v944 = vunpack.c.h.b16 %v237
    %v945 = vunpack.c.l.b16 %v238
    %v946 = vunpack.c.h.b16 %v238
    %v947 = vunpack.c.l.b16 %v239
    %v948 = vunpack.c.h.b16 %v239
    %v949 = vunpack.c.l.b16 %v240
    %v950 = vunpack.c.h.b16 %v240
    %v951 = vunpack.c.l.b16 %v241
    %v952 = vunpack.c.h.b16 %v241
    %v953 = vunpack.c.l.b16 %v242
    %v954 = vunpack.c.h.b16 %v242
    %v955 = vunpack.c.l.b16 %v243
    %v956 = vunpack.c.h.b16 %v243
    %v957 = vunpack.c.l.b16 %v244
    %v958 = vunpack.c.h.b16 %v244
    %v959 = vunpack.c.l.b16 %v245
    %v960 = vunpack.c.h.b16 %v245
    %v961 = vunpack.c.l.b16 %v246
    %v962 = vunpack.c.h.b16 %v246
    %v963 = vunpack.c.l.b16 %v247
    %v964 = vunpack.c.h.b16 %v247
    %v965 = vunpack.c.l.b16 %v248
    %v966 = vunpack.c.h.b16 %v248
    %v967 = vunpack.c.l.b16 %v249
    %v968 = vunpack.c.h.b16 %v249
    %v969 = vunpack.c.l.b16 %v250
    %v970 = vunpack.c.h.b16 %v250
    %v971 = vunpack.c.l.b16 %v251
    %v972 = vunpack.c.h.b16 %v251
    %v973 = vunpack.c.l.b16 %v252
    %v974 = vunpack.c.h.b16 %v252
    %v975 = vunpack.c.l.b16 %v253
    %v976 = vunpack.c.h.b16 %v253
    %v977 = vunpack.c.l.b16 %v254
    %v978 = vunpack.c.h.b16 %v254
    %v979 = vunpack.c.l.b16 %v255
    %v980 = vunpack.c.h.b16 %v255
    %v981 = vunpack.c.l.b16 %v256
    %v982 = vunpack.c.h.b16 %v256
    %v983 = vunpack.c.l.b16 %v257
    %v984 = vunpack.c.h.b16 %v257
    %v985 = vunpack.c.l.b16 %v258
    %v986 = vunpack.c.h.b16 %v258
    %v987 = vunpack.c.l.b16 %v259
    %v988 = vunpack.c.h.b16 %v259
    %v989 = vunpack.c.l.b16 %v260
    %v990 = vunpack.c.h.b16 %v260
    %v991 = vunpack.c.l.b16 %v261
    %v992 = vunpack.c.h.b16 %v261
    %v993 = vunpack.c.l.b16 %v262
    %v994 = vunpack.c.h.b16 %v262
    %v995 = vunpack.c.l.b16 %v263
    %v996 = vunpack.c.h.b16 %v263
    %v997 = vunpack.c.l.b16 %v264
    %v998 = vunpack.c.h.b16 %v264
    %v999 = vunpack.c.l.b16 %v265
    %v1000 = vunpack.c.h.b16 %v265
    %v1001 = vunpack.c.l.b16 %v266
    %v1002 = vunpack.c.h.b16 %v266
    %v1003 = vunpack.c.l.b16 %v267
    %v1004 = vunpack.c.h.b16 %v267
    %v1005 = vunpack.c.l.b16 %v268
    %v1006 = vunpack.c.h.b16 %v268
    %v1007 = vunpack.c.l.b16 %v269
    %v1008 = vunpack.c.h.b16 %v269
    %v1009 = vunpack.c.l.b16 %v270
    %v1010 = vunpack.c.h.b16 %v270
    %v1011 = vunpack.c.l.b16 %v271
    %v1012 = vunpack.c.h.b16 %v271
    %v1013 = vunpack.c.l.b16 %v272
    %v1014 = vunpack.c.h.b16 %v272
    %v1015 = vunpack.c.l.b16 %v273
    %v1016 = vunpack.c.h.b16 %v273
    %v1017 = vunpack.c.l.b16 %v274
    %v1018 = vunpack.c.h.b16 %v274
    %v1019 = vunpack.c.l.b16 %v275
    %v1020 = vunpack.c.h.b16 %v275
    %v1021 = vunpack.c.l.b16 %v276
    %v1022 = vunpack.c.h.b16 %v276
    %v1023 = vunpack.c.l.b16 %v277
    %v1024 = vunpack.c.h.b16 %v277
    %v1025 = vunpack.c.l.b16 %v278
    %v1026 = vunpack.c.h.b16 %v278
    %v1027 = vunpack.c.l.b16 %v279
    %v1028 = vunpack.c.h.b16 %v279
    %v1029 = vunpack.c.l.b16 %v280
    %v1030 = vunpack.c.h.b16 %v280
    %v1031 = vunpack.c.l.b16 %v281
    %v1032 = vunpack.c.h.b16 %v281
    %v1033 = vunpack.c.l.b16 %v282
    %v1034 = vunpack.c.h.b16 %v282
    %v1035 = vunpack.c.l.b16 %v283
    %v1036 = vunpack.c.h.b16 %v283
    %v1037 = vunpack.c.l.b16 %v284
    %v1038 = vunpack.c.h.b16 %v284
    %v1039 = vunpack.c.l.b16 %v285
    %v1040 = vunpack.c.h.b16 %v285
    %v1041 = vunpack.c.l.b16 %v286
    %v1042 = vunpack.c.h.b16 %v286
    %v1043 = vunpack.c.l.b16 %v287
    %v1044 = vunpack.c.h.b16 %v287
    %v1045 = vunpack.c.l.b16 %v288
    %v1046 = vunpack.c.h.b16 %v288
    %v1047 = vunpack.c.l.b16 %v289
    %v1048 = vunpack.c.h.b16 %v289
    %v1049 = vunpack.c.l.b16 %v290
    %v1050 = vunpack.c.h.b16 %v290
    %v1051 = vunpack.c.l.b16 %v291
    %v1052 = vunpack.c.h.b16 %v291
    %v1053 = vunpack.c.l.b16 %v292
    %v1054 = vunpack.c.h.b16 %v292
    %v1055 = vunpack.c.l.b16 %v293
    %v1056 = vunpack.c.h.b16 %v293
    %v1057 = vunpack.c.l.b16 %v294
    %v1058 = vunpack.c.h.b16 %v294
    %v1059 = vunpack.c.l.b16 %v295
    %v1060 = vunpack.c.h.b16 %v295
    %v1061 = vunpack.c.l.b16 %v296
    %v1062 = vunpack.c.h.b16 %v296
    %v1063 = vunpack.c.l.b16 %v297
    %v1064 = vunpack.c.h.b16 %v297
    %v1065 = vunpack.c.l.b16 %v298
    %v1066 = vunpack.c.h.b16 %v298
    %v1067 = vunpack.c.l.b16 %v299
    %v1068 = vunpack.c.h.b16 %v299
    %v1069 = vunpack.c.l.b16 %v300
    %v1070 = vunpack.c.h.b16 %v300
    %v1071 = vunpack.c.l.b16 %v301
    %v1072 = vunpack.c.h.b16 %v301
    %v1073 = vunpack.c.l.b16 %v302
    %v1074 = vunpack.c.h.b16 %v302
    %v1075 = vunpack.c.l.b16 %v303
    %v1076 = vunpack.c.h.b16 %v303
    %v1077 = vunpack.c.l.b16 %v304
    %v1078 = vunpack.c.h.b16 %v304
    %v1079 = vunpack.c.l.b16 %v305
    %v1080 = vunpack.c.h.b16 %v305
    %v1081 = vunpack.c.l.b16 %v306
    %v1082 = vunpack.c.h.b16 %v306
    %v1083 = vunpack.c.l.b16 %v307
    %v1084 = vunpack.c.h.b16 %v307
    %v1085 = vunpack.c.l.b16 %v308
    %v1086 = vunpack.c.h.b16 %v308
    %v1087 = vunpack.c.l.b16 %v309
    %v1088 = vunpack.c.h.b16 %v309
    %v1089 = vunpack.c.l.b16 %v310
    %v1090 = vunpack.c.h.b16 %v310
    %v1091 = vunpack.c.l.b16 %v311
    %v1092 = vunpack.c.h.b16 %v311
    %v1093 = vunpack.c.l.b16 %v312
    %v1094 = vunpack.c.h.b16 %v312
    %v1095 = vunpack.c.l.b16 %v313
    %v1096 = vunpack.c.h.b16 %v313
    %v1097 = vunpack.c.l.b16 %v314
    %v1098 = vunpack.c.h.b16 %v314
    %v1099 = vunpack.c.l.b16 %v315
    %v1100 = vunpack.c.h.b16 %v315
    %v1101 = vunpack.c.l.b16 %v316
    %v1102 = vunpack.c.h.b16 %v316
    %v1103 = vunpack.c.l.b16 %v317
    %v1104 = vunpack.c.h.b16 %v317
    %v1105 = vunpack.c.l.b16 %v318
    %v1106 = vunpack.c.h.b16 %v318
    %v1107 = vunpack.c.l.b16 %v319
    %v1108 = vunpack.c.h.b16 %v319
    %v1109 = vunpack.c.l.b16 %v320
    %v1110 = vunpack.c.h.b16 %v320
    %v1111 = vpack.c.b16 %v603, %v599
    %v1112 = vpack.c.b16 %v604, %v600
    %v1113 = vpack.c.b16 %v605, %v601
    %v1114 = vpack.c.b16 %v606, %v602
    %v1115 = vpack.c.b16 %v611, %v607
    %v1116 = vpack.c.b16 %v612, %v608
    %v1117 = vpack.c.b16 %v613, %v609
    %v1118 = vpack.c.b16 %v614, %v610
    %v1119 = vpack.c.b16 %v619, %v615
    %v1120 = vpack.c.b16 %v620, %v616
    %v1121 = vpack.c.b16 %v621, %v617
    %v1122 = vpack.c.b16 %v622, %v618
    %v1123 = vpack.c.b16 %v627, %v623
    %v1124 = vpack.c.b16 %v628, %v624
    %v1125 = vpack.c.b16 %v629, %v625
    %v1126 = vpack.c.b16 %v630, %v626
    %v1127 = vpack.c.b16 %v635, %v631
    %v1128 = vpack.c.b16 %v636, %v632
    %v1129 = vpack.c.b16 %v637, %v633
    %v1130 = vpack.c.b16 %v638, %v634
    %v1131 = vpack.c.b16 %v643, %v639
    %v1132 = vpack.c.b16 %v644, %v640
    %v1133 = vpack.c.b16 %v645, %v641
    %v1134 = vpack.c.b16 %v646, %v642
    %v1135 = vpack.c.b16 %v651, %v647
    %v1136 = vpack.c.b16 %v652, %v648
    %v1137 = vpack.c.b16 %v653, %v649
    %v1138 = vpack.c.b16 %v654, %v650
    %v1139 = vpack.c.b16 %v659, %v655
    %v1140 = vpack.c.b16 %v660, %v656
    %v1141 = vpack.c.b16 %v661, %v657
    %v1142 = vpack.c.b16 %v662, %v658
    %v1143 = vpack.c.b16 %v667, %v663
    %v1144 = vpack.c.b16 %v668, %v664
    %v1145 = vpack.c.b16 %v669, %v665
    %v1146 = vpack.c.b16 %v670, %v666
    %v1147 = vpack.c.b16 %v675, %v671
    %v1148 = vpack.c.b16 %v676, %v672
    %v1149 = vpack.c.b16 %v677, %v673
    %v1150 = vpack.c.b16 %v678, %v674
    %v1151 = vpack.c.b16 %v683, %v679
    %v1152 = vpack.c.b16 %v684, %v680
    %v1153 = vpack.c.b16 %v685, %v681
    %v1154 = vpack.c.b16 %v686, %v682
    %v1155 = vpack.c.b16 %v691, %v687
    %v1156 = vpack.c.b16 %v692, %v688
    %v1157 = vpack.c.b16 %v693, %v689
    %v1158 = vpack.c.b16 %v694, %v690
    %v1159 = vpack.c.b16 %v699, %v695
    %v1160 = vpack.c.b16 %v700, %v696
    %v1161 = vpack.c.b16 %v701, %v697
    %v1162 = vpack.c.b16 %v702, %v698
    %v1163 = vpack.c.b16 %v707, %v703
    %v1164 = vpack.c.b16 %v708, %v704
    %v1165 = vpack.c.b16 %v709, %v705
    %v1166 = vpack.c.b16 %v710, %v706
    %v1167 = vpack.c.b16 %v715, %v711
    %v1168 = vpack.c.b16 %v716, %v712
    %v1169 = vpack.c.b16 %v717, %v713
    %v1170 = vpack.c.b16 %v718, %v714
    %v1171 = vpack.c.b16 %v723, %v719
    %v1172 = vpack.c.b16 %v724, %v720
    %v1173 = vpack.c.b16 %v725, %v721
    %v1174 = vpack.c.b16 %v726, %v722
    %v1175 = vpack.c.b16 %v731, %v727
    %v1176 = vpack.c.b16 %v732, %v728
    %v1177 = vpack.c.b16 %v733, %v729
    %v1178 = vpack.c.b16 %v734, %v730
    %v1179 = vpack.c.b16 %v739, %v735
    %v1180 = vpack.c.b16 %v740, %v736
    %v1181 = vpack.c.b16 %v741, %v737
    %v1182 = vpack.c.b16 %v742, %v738
    %v1183 = vpack.c.b16 %v747, %v743
    %v1184 = vpack.c.b16 %v748, %v744
    %v1185 = vpack.c.b16 %v749, %v745
    %v1186 = vpack.c.b16 %v750, %v746
    %v1187 = vpack.c.b16 %v755, %v751
    %v1188 = vpack.c.b16 %v756, %v752
    %v1189 = vpack.c.b16 %v757, %v753
    %v1190 = vpack.c.b16 %v758, %v754
    %v1191 = vpack.c.b16 %v763, %v759
    %v1192 = vpack.c.b16 %v764, %v760
    %v1193 = vpack.c.b16 %v765, %v761
    %v1194 = vpack.c.b16 %v766, %v762
    %v1195 = vpack.c.b16 %v771, %v767
    %v1196 = vpack.c.b16 %v772, %v768
    %v1197 = vpack.c.b16 %v773, %v769
    %v1198 = vpack.c.b16 %v774, %v770
    %v1199 = vpack.c.b16 %v779, %v775
    %v1200 = vpack.c.b16 %v780, %v776
    %v1201 = vpack.c.b16 %v781, %v777
    %v1202 = vpack.c.b16 %v782, %v778
    %v1203 = vpack.c.b16 %v787, %v783
    %v1204 = vpack.c.b16 %v788, %v784
    %v1205 = vpack.c.b16 %v789, %v785
    %v1206 = vpack.c.b16 %v790, %v786
    %v1207 = vpack.c.b16 %v795, %v791
    %v1208 = vpack.c.b16 %v796, %v792
    %v1209 = vpack.c.b16 %v797, %v793
    %v1210 = vpack.c.b16 %v798, %v794
    %v1211 = vpack.c.b16 %v803, %v799
    %v1212 = vpack.c.b16 %v804, %v800
    %v1213 = vpack.c.b16 %v805, %v801
    %v1214 = vpack.c.b16 %v806, %v802
    %v1215 = vpack.c.b16 %v811, %v807
    %v1216 = vpack.c.b16 %v812, %v808
    %v1217 = vpack.c.b16 %v813, %v809
    %v1218 = vpack.c.b16 %v814, %v810
    %v1219 = vpack.c.b16 %v819, %v815
    %v1220 = vpack.c.b16 %v820, %v816
    %v1221 = vpack.c.b16 %v821, %v817
    %v1222 = vpack.c.b16 %v822, %v818
    %v1223 = vpack.c.b16 %v827, %v823
    %v1224 = vpack.c.b16 %v828, %v824
    %v1225 = vpack.c.b16 %v829, %v825
    %v1226 = vpack.c.b16 %v830, %v826
    %v1227 = vpack.c.b16 %v835, %v831
    %v1228 = vpack.c.b16 %v836, %v832
    %v1229 = vpack.c.b16 %v837, %v833
    %v1230 = vpack.c.b16 %v838, %v834
    %v1231 = vpack.c.b16 %v843, %v839
    %v1232 = vpack.c.b16 %v844, %v840
    %v1233 = vpack.c.b16 %v845, %v841
    %v1234 = vpack.c.b16 %v846, %v842
    %v1235 = vpack.c.b16 %v851, %v847
    %v1236 = vpack.c.b16 %v852, %v848
    %v1237 = vpack.c.b16 %v853, %v849
    %v1238 = vpack.c.b16 %v854, %v850
    %v1239 = vpack.c.b16 %v859, %v855
    %v1240 = vpack.c.b16 %v860, %v856
    %v1241 = vpack.c.b16 %v861, %v857
    %v1242 = vpack.c.b16 %v862, %v858
    %v1243 = vpack.c.b16 %v867, %v863
    %v1244 = vpack.c.b16 %v868, %v864
    %v1245 = vpack.c.b16 %v869, %v865
    %v1246 = vpack.c.b16 %v870, %v866
    %v1247 = vpack.c.b16 %v875, %v871
    %v1248 = vpack.c.b16 %v876, %v872
    %v1249 = vpack.c.b16 %v877, %v873
    %v1250 = vpack.c.b16 %v878, %v874
    %v1251 = vpack.c.b16 %v883, %v879
    %v1252 = vpack.c.b16 %v884, %v880
    %v1253 = vpack.c.b16 %v885, %v881
    %v1254 = vpack.c.b16 %v886, %v882
    %v1255 = vpack.c.b16 %v891, %v887
    %v1256 = vpack.c.b16 %v892, %v888
    %v1257 = vpack.c.b16 %v893, %v889
    %v1258 = vpack.c.b16 %v894, %v890
    %v1259 = vpack.c.b16 %v899, %v895
    %v1260 = vpack.c.b16 %v900, %v896
    %v1261 = vpack.c.b16 %v901, %v897
    %v1262 = vpack.c.b16 %v902, %v898
    %v1263 = vpack.c.b16 %v907, %v903
    %v1264 = vpack.c.b16 %v908, %v904
    %v1265 = vpack.c.b16 %v909, %v905
    %v1266 = vpack.c.b16 %v910, %v906
    %v1267 = vpack.c.b16 %v915, %v911
    %v1268 = vpack.c.b16 %v916, %v912
    %v1269 = vpack.c.b16 %v917, %v913
    %v1270 = vpack.c.b16 %v918, %v914
    %v1271 = vpack.c.b16 %v923, %v919
    %v1272 = vpack.c.b16 %v924, %v920
    %v1273 = vpack.c.b16 %v925, %v921
    %v1274 = vpack.c.b16 %v926, %v922
    %v1275 = vpack.c.b16 %v931, %v927
    %v1276 = vpack.c.b16 %v932, %v928
    %v1277 = vpack.c.b16 %v933, %v929
    %v1278 = vpack.c.b16 %v934, %v930
    %v1279 = vpack.c.b16 %v939, %v935
    %v1280 = vpack.c.b16 %v940, %v936
    %v1281 = vpack.c.b16 %v941, %v937
    %v1282 = vpack.c.b16 %v942, %v938
    %v1283 = vpack.c.b16 %v947, %v943
    %v1284 = vpack.c.b16 %v948, %v944
    %v1285 = vpack.c.b16 %v949, %v945
    %v1286 = vpack.c.b16 %v950, %v946
    %v1287 = vpack.c.b16 %v955, %v951
    %v1288 = vpack.c.b16 %v956, %v952
    %v1289 = vpack.c.b16 %v957, %v953
    %v1290 = vpack.c.b16 %v958, %v954
    %v1291 = vpack.c.b16 %v963, %v959
    %v1292 = vpack.c.b16 %v964, %v960
    %v1293 = vpack.c.b16 %v965, %v961
    %v1294 = vpack.c.b16 %v966, %v962
    %v1295 = vpack.c.b16 %v971, %v967
    %v1296 = vpack.c.b16 %v972, %v968
    %v1297 = vpack.c.b16 %v973, %v969
    %v1298 = vpack.c.b16 %v974, %v970
    %v1299 = vpack.c.b16 %v979, %v975
    %v1300 = vpack.c.b16 %v980, %v976
    %v1301 = vpack.c.b16 %v981, %v977
    %v1302 = vpack.c.b16 %v982, %v978
    %v1303 = vpack.c.b16 %v987, %v983
    %v1304 = vpack.c.b16 %v988, %v984
    %v1305 = vpack.c.b16 %v989, %v985
    %v1306 = vpack.c.b16 %v990, %v986
    %v1307 = vpack.c.b16 %v995, %v991
    %v1308 = vpack.c.b16 %v996, %v992
    %v1309 = vpack.c.b16 %v997, %v993
    %v1310 = vpack.c.b16 %v998, %v994
    %v1311 = vpack.c.b16 %v1003, %v999
    %v1312 = vpack.c.b16 %v1004, %v1000
    %v1313 = vpack.c.b16 %v1005, %v1001
    %v1314 = vpack.c.b16 %v1006, %v1002
    %v1315 = vpack.c.b16 %v1011, %v1007
    %v1316 = vpack.c.b16 %v1012, %v1008
    %v1317 = vpack.c.b16 %v1013, %v1009
    %v1318 = vpack.c.b16 %v1014, %v1010
    %v1319 = vpack.c.b16 %v1019, %v1015
    %v1320 = vpack.c.b16 %v1020, %v1016
    %v1321 = vpack.c.b16 %v1021, %v1017
    %v1322 = vpack.c.b16 %v1022, %v1018
    %v1323 = vpack.c.b16 %v1027, %v1023
    %v1324 = vpack.c.b16 %v1028, %v1024
    %v1325 = vpack.c.b16 %v1029, %v1025
    %v1326 = vpack.c.b16 %v1030, %v1026
    %v1327 = vpack.c.b16 %v1035, %v1031
    %v1328 = vpack.c.b16 %v1036, %v1032
    %v1329 = vpack.c.b16 %v1037, %v1033
    %v1330 = vpack.c.b16 %v1038, %v1034
    %v1331 = vpack.c.b16 %v1043, %v1039
    %v1332 = vpack.c.b16 %v1044, %v1040
    %v1333 = vpack.c.b16 %v1045, %v1041
    %v1334 = vpack.c.b16 %v1046, %v1042
    %v1335 = vpack.c.b16 %v1051, %v1047
    %v1336 = vpack.c.b16 %v1052, %v1048
    %v1337 = vpack.c.b16 %v1053, %v1049
    %v1338 = vpack.c.b16 %v1054, %v1050
    %v1339 = vpack.c.b16 %v1059, %v1055
    %v1340 = vpack.c.b16 %v1060, %v1056
    %v1341 = vpack.c.b16 %v1061, %v1057
    %v1342 = vpack.c.b16 %v1062, %v1058
    %v1343 = vpack.c.b16 %v1067, %v1063
    %v1344 = vpack.c.b16 %v1068, %v1064
    %v1345 = vpack.c.b16 %v1069, %v1065
    %v1346 = vpack.c.b16 %v1070, %v1066
    %v1347 = vpack.c.b16 %v1075, %v1071
    %v1348 = vpack.c.b16 %v1076, %v1072
    %v1349 = vpack.c.b16 %v1077, %v1073
    %v1350 = vpack.c.b16 %v1078, %v1074
    %v1351 = vpack.c.b16 %v1083, %v1079
    %v1352 = vpack.c.b16 %v1084, %v1080
    %v1353 = vpack.c.b16 %v1085, %v1081
    %v1354 = vpack.c.b16 %v1086, %v1082
    %v1355 = vpack.c.b16 %v1091, %v1087
    %v1356 = vpack.c.b16 %v1092, %v1088
    %v1357 = vpack.c.b16 %v1093, %v1089
    %v1358 = vpack.c.b16 %v1094, %v1090
    %v1359 = vpack.c.b16 %v1099, %v1095
    %v1360 = vpack.c.b16 %v1100, %v1096
    %v1361 = vpack.c.b16 %v1101, %v1097
    %v1362 = vpack.c.b16 %v1102, %v1098
    %v1363 = vpack.c.b16 %v1107, %v1103
    %v1364 = vpack.c.b16 %v1108, %v1104
    %v1365 = vpack.c.b16 %v1109, %v1105
    %v1366 = vpack.c.b16 %v1110, %v1106
    %1623 = vmatprep.subr.bf16.mxu0 %v1112
    %1624 = vmatpush1.bf16.msra.mxu0 %v1111
    %1625 = vmatprep.subr.bf16.mxu0 %v1116
    %1626 = vmatpush1.bf16.msra.mxu0 %v1115
    %1627 = vmatprep.subr.bf16.mxu0 %v1120
    %1628 = vmatpush1.bf16.msra.mxu0 %v1119
    %1629 = vmatprep.subr.bf16.mxu0 %v1124
    %1630 = vmatpush1.bf16.msra.mxu0 %v1123
    %1631 = vmatprep.subr.bf16.mxu0 %v1128
    %1632 = vmatpush1.bf16.msra.mxu0 %v1127
    %1633 = vmatprep.subr.bf16.mxu0 %v1132
    %1634 = vmatpush1.bf16.msra.mxu0 %v1131
    %1635 = vmatprep.subr.bf16.mxu0 %v1136
    %1636 = vmatpush1.bf16.msra.mxu0 %v1135
    %1637 = vmatprep.subr.bf16.mxu0 %v1140
    %1638 = vmatpush1.bf16.msra.mxu0 %v1139
    %1639 = vmatprep.subr.bf16.mxu0 %v1144
    %1640 = vmatpush1.bf16.msra.mxu0 %v1143
    %1641 = vmatprep.subr.bf16.mxu0 %v1148
    %1642 = vmatpush1.bf16.msra.mxu0 %v1147
    %1643 = vmatprep.subr.bf16.mxu0 %v1152
    %1644 = vmatpush1.bf16.msra.mxu0 %v1151
    %1645 = vmatprep.subr.bf16.mxu0 %v1156
    %1646 = vmatpush1.bf16.msra.mxu0 %v1155
    %1647 = vmatprep.subr.bf16.mxu0 %v1160
    %1648 = vmatpush1.bf16.msra.mxu0 %v1159
    %1649 = vmatprep.subr.bf16.mxu0 %v1164
    %1650 = vmatpush1.bf16.msra.mxu0 %v1163
    %1651 = vmatprep.subr.bf16.mxu0 %v1168
    %1652 = vmatpush1.bf16.msra.mxu0 %v1167
    %1653 = vmatprep.subr.bf16.mxu0 %v1172
    %1654 = vmatpush1.bf16.msra.mxu0 %v1171
    %1655 = vmatprep.mubr.bf16.mxu0 %v58
    %1656 = vmatmul.mubr.bf16.gmra.mrb[0].mxu0 %v57
    %v1657 = vpop.f32.mrb[0].mxu0
    %v1658 = vadd.f32 %v326, %v1657
    %v1659 = vpop.f32.mrb[0].mxu0
    %v1660 = vadd.f32 %v330, %v1659
    %v1661 = vpop.f32.mrb[0].mxu0
    %v1662 = vpop.f32.mrb[0].mxu0
    %1663 = vdwg.mxu0
    %1664 = vmatprep.subr.bf16.mxu0 %v1176
    %1665 = vmatpush1.bf16.msra.mxu0 %v1175
    %1666 = vmatprep.subr.bf16.mxu0 %v1180
    %1667 = vmatpush1.bf16.msra.mxu0 %v1179
    %1668 = vmatprep.subr.bf16.mxu0 %v1184
    %1669 = vmatpush1.bf16.msra.mxu0 %v1183
    %1670 = vmatprep.subr.bf16.mxu0 %v1188
    %1671 = vmatpush1.bf16.msra.mxu0 %v1187
    %1672 = vmatprep.subr.bf16.mxu0 %v1192
    %1673 = vmatpush1.bf16.msra.mxu0 %v1191
    %1674 = vmatprep.subr.bf16.mxu0 %v1196
    %1675 = vmatpush1.bf16.msra.mxu0 %v1195
    %1676 = vmatprep.subr.bf16.mxu0 %v1200
    %1677 = vmatpush1.bf16.msra.mxu0 %v1199
    %1678 = vmatprep.subr.bf16.mxu0 %v1204
    %1679 = vmatpush1.bf16.msra.mxu0 %v1203
    %1680 = vmatprep.subr.bf16.mxu0 %v1208
    %1681 = vmatpush1.bf16.msra.mxu0 %v1207
    %1682 = vmatprep.subr.bf16.mxu0 %v1212
    %1683 = vmatpush1.bf16.msra.mxu0 %v1211
    %1684 = vmatprep.subr.bf16.mxu0 %v1216
    %1685 = vmatpush1.bf16.msra.mxu0 %v1215
    %1686 = vmatprep.subr.bf16.mxu0 %v1220
    %1687 = vmatpush1.bf16.msra.mxu0 %v1219
    %1688 = vmatprep.subr.bf16.mxu0 %v1224
    %1689 = vmatpush1.bf16.msra.mxu0 %v1223
    %1690 = vmatprep.subr.bf16.mxu0 %v1228
    %1691 = vmatpush1.bf16.msra.mxu0 %v1227
    %1692 = vmatprep.subr.bf16.mxu0 %v1232
    %1693 = vmatpush1.bf16.msra.mxu0 %v1231
    %1694 = vmatprep.subr.bf16.mxu0 %v1236
    %1695 = vmatpush1.bf16.msra.mxu0 %v1235
    %1696 = vmatprep.mubr.bf16.mxu0 %v60
    %1697 = vmatmul.mubr.bf16.gmra.mrb[0].mxu0 %v59
    %v1698 = vpop.f32.mrb[0].mxu0
    %v1699 = vadd.f32 %v1658, %v1698
    %v1700 = vpop.f32.mrb[0].mxu0
    %v1701 = vadd.f32 %v1660, %v1700
    %v1702 = vpop.f32.mrb[0].mxu0
    %v1703 = vpop.f32.mrb[0].mxu0
    %1704 = vdwg.mxu0
    %1705 = vmatprep.subr.bf16.mxu0 %v1240
    %1706 = vmatpush1.bf16.msra.mxu0 %v1239
    %1707 = vmatprep.subr.bf16.mxu0 %v1244
    %1708 = vmatpush1.bf16.msra.mxu0 %v1243
    %1709 = vmatprep.subr.bf16.mxu0 %v1248
    %1710 = vmatpush1.bf16.msra.mxu0 %v1247
    %1711 = vmatprep.subr.bf16.mxu0 %v1252
    %1712 = vmatpush1.bf16.msra.mxu0 %v1251
    %1713 = vmatprep.subr.bf16.mxu0 %v1256
    %1714 = vmatpush1.bf16.msra.mxu0 %v1255
    %1715 = vmatprep.subr.bf16.mxu0 %v1260
    %1716 = vmatpush1.bf16.msra.mxu0 %v1259
    %1717 = vmatprep.subr.bf16.mxu0 %v1264
    %1718 = vmatpush1.bf16.msra.mxu0 %v1263
    %1719 = vmatprep.subr.bf16.mxu0 %v1268
    %1720 = vmatpush1.bf16.msra.mxu0 %v1267
    %1721 = vmatprep.subr.bf16.mxu0 %v1272
    %1722 = vmatpush1.bf16.msra.mxu0 %v1271
    %1723 = vmatprep.subr.bf16.mxu0 %v1276
    %1724 = vmatpush1.bf16.msra.mxu0 %v1275
    %1725 = vmatprep.subr.bf16.mxu0 %v1280
    %1726 = vmatpush1.bf16.msra.mxu0 %v1279
    %1727 = vmatprep.subr.bf16.mxu0 %v1284
    %1728 = vmatpush1.bf16.msra.mxu0 %v1283
    %1729 = vmatprep.subr.bf16.mxu0 %v1288
    %1730 = vmatpush1.bf16.msra.mxu0 %v1287
    %1731 = vmatprep.subr.bf16.mxu0 %v1292
    %1732 = vmatpush1.bf16.msra.mxu0 %v1291
    %1733 = vmatprep.subr.bf16.mxu0 %v1296
    %1734 = vmatpush1.bf16.msra.mxu0 %v1295
    %1735 = vmatprep.subr.bf16.mxu0 %v1300
    %1736 = vmatpush1.bf16.msra.mxu0 %v1299
    %1737 = vmatprep.mubr.bf16.mxu0 %v62
    %1738 = vmatmul.mubr.bf16.gmra.mrb[0].mxu0 %v61
    %v1739 = vpop.f32.mrb[0].mxu0
    %v1740 = vadd.f32 %v1699, %v1739
    %v1741 = vpop.f32.mrb[0].mxu0
    %v1742 = vadd.f32 %v1701, %v1741
    %v1743 = vpop.f32.mrb[0].mxu0
    %v1744 = vpop.f32.mrb[0].mxu0
    %1745 = vdwg.mxu0
    %1746 = vmatprep.subr.bf16.mxu0 %v1304
    %1747 = vmatpush1.bf16.msra.mxu0 %v1303
    %1748 = vmatprep.subr.bf16.mxu0 %v1308
    %1749 = vmatpush1.bf16.msra.mxu0 %v1307
    %1750 = vmatprep.subr.bf16.mxu0 %v1312
    %1751 = vmatpush1.bf16.msra.mxu0 %v1311
    %1752 = vmatprep.subr.bf16.mxu0 %v1316
    %1753 = vmatpush1.bf16.msra.mxu0 %v1315
    %1754 = vmatprep.subr.bf16.mxu0 %v1320
    %1755 = vmatpush1.bf16.msra.mxu0 %v1319
    %1756 = vmatprep.subr.bf16.mxu0 %v1324
    %1757 = vmatpush1.bf16.msra.mxu0 %v1323
    %1758 = vmatprep.subr.bf16.mxu0 %v1328
    %1759 = vmatpush1.bf16.msra.mxu0 %v1327
    %1760 = vmatprep.subr.bf16.mxu0 %v1332
    %1761 = vmatpush1.bf16.msra.mxu0 %v1331
    %1762 = vmatprep.subr.bf16.mxu0 %v1336
    %1763 = vmatpush1.bf16.msra.mxu0 %v1335
    %1764 = vmatprep.subr.bf16.mxu0 %v1340
    %1765 = vmatpush1.bf16.msra.mxu0 %v1339
    %1766 = vmatprep.subr.bf16.mxu0 %v1344
    %1767 = vmatpush1.bf16.msra.mxu0 %v1343
    %1768 = vmatprep.subr.bf16.mxu0 %v1348
    %1769 = vmatpush1.bf16.msra.mxu0 %v1347
    %1770 = vmatprep.subr.bf16.mxu0 %v1352
    %1771 = vmatpush1.bf16.msra.mxu0 %v1351
    %1772 = vmatprep.subr.bf16.mxu0 %v1356
    %1773 = vmatpush1.bf16.msra.mxu0 %v1355
    %1774 = vmatprep.subr.bf16.mxu0 %v1360
    %1775 = vmatpush1.bf16.msra.mxu0 %v1359
    %1776 = vmatprep.subr.bf16.mxu0 %v1364
    %1777 = vmatpush1.bf16.msra.mxu0 %v1363
    %1778 = vmatprep.mubr.bf16.mxu0 %v64
    %1779 = vmatmul.mubr.bf16.gmra.mrb[0].mxu0 %v63
    %v1780 = vpop.f32.mrb[0].mxu0
    %v1781 = vadd.f32 %v1740, %v1780
    %v1782 = vpop.f32.mrb[0].mxu0
    %v1783 = vadd.f32 %v1742, %v1782
    %v1784 = vpop.f32.mrb[0].mxu0
    %v1785 = vpop.f32.mrb[0].mxu0
    %1786 = vdwg.mxu0
    %1787 = vmatprep.subr.bf16.mxu0 %v1114
    %1788 = vmatpush1.bf16.msra.mxu0 %v1113
    %1789 = vmatprep.subr.bf16.mxu0 %v1118
    %1790 = vmatpush1.bf16.msra.mxu0 %v1117
    %1791 = vmatprep.subr.bf16.mxu0 %v1122
    %1792 = vmatpush1.bf16.msra.mxu0 %v1121
    %1793 = vmatprep.subr.bf16.mxu0 %v1126
    %1794 = vmatpush1.bf16.msra.mxu0 %v1125
    %1795 = vmatprep.subr.bf16.mxu0 %v1130
    %1796 = vmatpush1.bf16.msra.mxu0 %v1129
    %1797 = vmatprep.subr.bf16.mxu0 %v1134
    %1798 = vmatpush1.bf16.msra.mxu0 %v1133
    %1799 = vmatprep.subr.bf16.mxu0 %v1138
    %1800 = vmatpush1.bf16.msra.mxu0 %v1137
    %1801 = vmatprep.subr.bf16.mxu0 %v1142
    %1802 = vmatpush1.bf16.msra.mxu0 %v1141
    %1803 = vmatprep.subr.bf16.mxu0 %v1146
    %1804 = vmatpush1.bf16.msra.mxu0 %v1145
    %1805 = vmatprep.subr.bf16.mxu0 %v1150
    %1806 = vmatpush1.bf16.msra.mxu0 %v1149
    %1807 = vmatprep.subr.bf16.mxu0 %v1154
    %1808 = vmatpush1.bf16.msra.mxu0 %v1153
    %1809 = vmatprep.subr.bf16.mxu0 %v1158
    %1810 = vmatpush1.bf16.msra.mxu0 %v1157
    %1811 = vmatprep.subr.bf16.mxu0 %v1162
    %1812 = vmatpush1.bf16.msra.mxu0 %v1161
    %1813 = vmatprep.subr.bf16.mxu0 %v1166
    %1814 = vmatpush1.bf16.msra.mxu0 %v1165
    %1815 = vmatprep.subr.bf16.mxu0 %v1170
    %1816 = vmatpush1.bf16.msra.mxu0 %v1169
    %1817 = vmatprep.subr.bf16.mxu0 %v1174
    %1818 = vmatpush1.bf16.msra.mxu0 %v1173
    %1819 = vmatprep.mubr.bf16.mxu0 %v58
    %1820 = vmatmul.mubr.bf16.gmra.mrb[0].mxu0 %v57
    %v1821 = vpop.f32.mrb[0].mxu0
    %v1822 = vadd.f32 %v334, %v1821
    %v1823 = vpop.f32.mrb[0].mxu0
    %v1824 = vadd.f32 %v338, %v1823
    %v1825 = vpop.f32.mrb[0].mxu0
    %v1826 = vpop.f32.mrb[0].mxu0
    %1827 = vdwg.mxu0
    %1828 = vmatprep.subr.bf16.mxu0 %v1178
    %1829 = vmatpush1.bf16.msra.mxu0 %v1177
    %1830 = vmatprep.subr.bf16.mxu0 %v1182
    %1831 = vmatpush1.bf16.msra.mxu0 %v1181
    %1832 = vmatprep.subr.bf16.mxu0 %v1186
    %1833 = vmatpush1.bf16.msra.mxu0 %v1185
    %1834 = vmatprep.subr.bf16.mxu0 %v1190
    %1835 = vmatpush1.bf16.msra.mxu0 %v1189
    %1836 = vmatprep.subr.bf16.mxu0 %v1194
    %1837 = vmatpush1.bf16.msra.mxu0 %v1193
    %1838 = vmatprep.subr.bf16.mxu0 %v1198
    %1839 = vmatpush1.bf16.msra.mxu0 %v1197
    %1840 = vmatprep.subr.bf16.mxu0 %v1202
    %1841 = vmatpush1.bf16.msra.mxu0 %v1201
    %1842 = vmatprep.subr.bf16.mxu0 %v1206
    %1843 = vmatpush1.bf16.msra.mxu0 %v1205
    %1844 = vmatprep.subr.bf16.mxu0 %v1210
    %1845 = vmatpush1.bf16.msra.mxu0 %v1209
    %1846 = vmatprep.subr.bf16.mxu0 %v1214
    %1847 = vmatpush1.bf16.msra.mxu0 %v1213
    %1848 = vmatprep.subr.bf16.mxu0 %v1218
    %1849 = vmatpush1.bf16.msra.mxu0 %v1217
    %1850 = vmatprep.subr.bf16.mxu0 %v1222
    %1851 = vmatpush1.bf16.msra.mxu0 %v1221
    %1852 = vmatprep.subr.bf16.mxu0 %v1226
    %1853 = vmatpush1.bf16.msra.mxu0 %v1225
    %1854 = vmatprep.subr.bf16.mxu0 %v1230
    %1855 = vmatpush1.bf16.msra.mxu0 %v1229
    %1856 = vmatprep.subr.bf16.mxu0 %v1234
    %1857 = vmatpush1.bf16.msra.mxu0 %v1233
    %1858 = vmatprep.subr.bf16.mxu0 %v1238
    %1859 = vmatpush1.bf16.msra.mxu0 %v1237
    %1860 = vmatprep.mubr.bf16.mxu0 %v60
    %1861 = vmatmul.mubr.bf16.gmra.mrb[0].mxu0 %v59
    %v1862 = vpop.f32.mrb[0].mxu0
    %v1863 = vadd.f32 %v1822, %v1862
    %v1864 = vpop.f32.mrb[0].mxu0
    %v1865 = vadd.f32 %v1824, %v1864
    %v1866 = vpop.f32.mrb[0].mxu0
    %v1867 = vpop.f32.mrb[0].mxu0
    %1868 = vdwg.mxu0
    %1869 = vmatprep.subr.bf16.mxu0 %v1242
    %1870 = vmatpush1.bf16.msra.mxu0 %v1241
    %1871 = vmatprep.subr.bf16.mxu0 %v1246
    %1872 = vmatpush1.bf16.msra.mxu0 %v1245
    %1873 = vmatprep.subr.bf16.mxu0 %v1250
    %1874 = vmatpush1.bf16.msra.mxu0 %v1249
    %1875 = vmatprep.subr.bf16.mxu0 %v1254
    %1876 = vmatpush1.bf16.msra.mxu0 %v1253
    %1877 = vmatprep.subr.bf16.mxu0 %v1258
    %1878 = vmatpush1.bf16.msra.mxu0 %v1257
    %1879 = vmatprep.subr.bf16.mxu0 %v1262
    %1880 = vmatpush1.bf16.msra.mxu0 %v1261
    %1881 = vmatprep.subr.bf16.mxu0 %v1266
    %1882 = vmatpush1.bf16.msra.mxu0 %v1265
    %1883 = vmatprep.subr.bf16.mxu0 %v1270
    %1884 = vmatpush1.bf16.msra.mxu0 %v1269
    %1885 = vmatprep.subr.bf16.mxu0 %v1274
    %1886 = vmatpush1.bf16.msra.mxu0 %v1273
    %1887 = vmatprep.subr.bf16.mxu0 %v1278
    %1888 = vmatpush1.bf16.msra.mxu0 %v1277
    %1889 = vmatprep.subr.bf16.mxu0 %v1282
    %1890 = vmatpush1.bf16.msra.mxu0 %v1281
    %1891 = vmatprep.subr.bf16.mxu0 %v1286
    %1892 = vmatpush1.bf16.msra.mxu0 %v1285
    %1893 = vmatprep.subr.bf16.mxu0 %v1290
    %1894 = vmatpush1.bf16.msra.mxu0 %v1289
    %1895 = vmatprep.subr.bf16.mxu0 %v1294
    %1896 = vmatpush1.bf16.msra.mxu0 %v1293
    %1897 = vmatprep.subr.bf16.mxu0 %v1298
    %1898 = vmatpush1.bf16.msra.mxu0 %v1297
    %1899 = vmatprep.subr.bf16.mxu0 %v1302
    %1900 = vmatpush1.bf16.msra.mxu0 %v1301
    %1901 = vmatprep.mubr.bf16.mxu0 %v62
    %1902 = vmatmul.mubr.bf16.gmra.mrb[0].mxu0 %v61
    %v1903 = vpop.f32.mrb[0].mxu0
    %v1904 = vadd.f32 %v1863, %v1903
    %v1905 = vpop.f32.mrb[0].mxu0
    %v1906 = vadd.f32 %v1865, %v1905
    %v1907 = vpop.f32.mrb[0].mxu0
    %v1908 = vpop.f32.mrb[0].mxu0
    %1909 = vdwg.mxu0
    %1910 = vmatprep.subr.bf16.mxu0 %v1306
    %1911 = vmatpush1.bf16.msra.mxu0 %v1305
    %1912 = vmatprep.subr.bf16.mxu0 %v1310
    %1913 = vmatpush1.bf16.msra.mxu0 %v1309
    %1914 = vmatprep.subr.bf16.mxu0 %v1314
    %1915 = vmatpush1.bf16.msra.mxu0 %v1313
    %1916 = vmatprep.subr.bf16.mxu0 %v1318
    %1917 = vmatpush1.bf16.msra.mxu0 %v1317
    %1918 = vmatprep.subr.bf16.mxu0 %v1322
    %1919 = vmatpush1.bf16.msra.mxu0 %v1321
    %1920 = vmatprep.subr.bf16.mxu0 %v1326
    %1921 = vmatpush1.bf16.msra.mxu0 %v1325
    %1922 = vmatprep.subr.bf16.mxu0 %v1330
    %1923 = vmatpush1.bf16.msra.mxu0 %v1329
    %1924 = vmatprep.subr.bf16.mxu0 %v1334
    %1925 = vmatpush1.bf16.msra.mxu0 %v1333
    %1926 = vmatprep.subr.bf16.mxu0 %v1338
    %1927 = vmatpush1.bf16.msra.mxu0 %v1337
    %1928 = vmatprep.subr.bf16.mxu0 %v1342
    %1929 = vmatpush1.bf16.msra.mxu0 %v1341
    %1930 = vmatprep.subr.bf16.mxu0 %v1346
    %1931 = vmatpush1.bf16.msra.mxu0 %v1345
    %1932 = vmatprep.subr.bf16.mxu0 %v1350
    %1933 = vmatpush1.bf16.msra.mxu0 %v1349
    %1934 = vmatprep.subr.bf16.mxu0 %v1354
    %1935 = vmatpush1.bf16.msra.mxu0 %v1353
    %1936 = vmatprep.subr.bf16.mxu0 %v1358
    %1937 = vmatpush1.bf16.msra.mxu0 %v1357
    %1938 = vmatprep.subr.bf16.mxu0 %v1362
    %1939 = vmatpush1.bf16.msra.mxu0 %v1361
    %1940 = vmatprep.subr.bf16.mxu0 %v1366
    %1941 = vmatpush1.bf16.msra.mxu0 %v1365
    %1942 = vmatprep.mubr.bf16.mxu0 %v64
    %1943 = vmatmul.mubr.bf16.gmra.mrb[0].mxu0 %v63
    %v1944 = vpop.f32.mrb[0].mxu0
    %v1945 = vadd.f32 %v1904, %v1944
    %v1946 = vpop.f32.mrb[0].mxu0
    %v1947 = vadd.f32 %v1906, %v1946
    %v1948 = vpop.f32.mrb[0].mxu0
    %v1949 = vpop.f32.mrb[0].mxu0
    %1950 = vdwg.mxu0
    %v1951 = vpack.c.bf16 %v1781, %v1781
    %v1952 = vpack.c.bf16 %v1783, %v1783
    %v1953 = vpack.c.bf16 %v1945, %v1945
    %v1954 = vpack.c.bf16 %v1947, %v1947
    %v1955 = vld [vmem:[#allocation4] sm:$0xf]
    %v1956 = vld [vmem:[#allocation4 + $0x4] sm:$0xf]
    %v1957 = vld [vmem:[#allocation4 + $0x8] sm:$0xf]
    %v1958 = vld [vmem:[#allocation4 + $0xc] sm:$0xf]
    %v1959 = vld [vmem:[#allocation4 + $0x10] sm:$0xf]
    %v1960 = vld [vmem:[#allocation4 + $0x14] sm:$0xf]
    %v1961 = vld [vmem:[#allocation4 + $0x18] sm:$0xf]
    %v1962 = vld [vmem:[#allocation4 + $0x1c] sm:$0xf]
    %v1963 = vld [vmem:[#allocation4 + $0x20] sm:$0xf]
    %v1964 = vld [vmem:[#allocation4 + $0x24] sm:$0xf]
    %v1965 = vld [vmem:[#allocation4 + $0x28] sm:$0xf]
    %v1966 = vld [vmem:[#allocation4 + $0x2c] sm:$0xf]
    %v1967 = vld [vmem:[#allocation4 + $0x30] sm:$0xf]
    %v1968 = vld [vmem:[#allocation4 + $0x34] sm:$0xf]
    %v1969 = vld [vmem:[#allocation4 + $0x38] sm:$0xf]
    %v1970 = vld [vmem:[#allocation4 + $0x3c] sm:$0xf]
    %v1971 = vld [vmem:[#allocation4 + $0x40] sm:$0xf]
    %v1972 = vld [vmem:[#allocation4 + $0x44] sm:$0xf]
    %v1973 = vld [vmem:[#allocation4 + $0x48] sm:$0xf]
    %v1974 = vld [vmem:[#allocation4 + $0x4c] sm:$0xf]
    %v1975 = vld [vmem:[#allocation4 + $0x50] sm:$0xf]
    %v1976 = vld [vmem:[#allocation4 + $0x54] sm:$0xf]
    %v1977 = vld [vmem:[#allocation4 + $0x58] sm:$0xf]
    %v1978 = vld [vmem:[#allocation4 + $0x5c] sm:$0xf]
    %v1979 = vld [vmem:[#allocation4 + $0x60] sm:$0xf]
    %v1980 = vld [vmem:[#allocation4 + $0x64] sm:$0xf]
    %v1981 = vld [vmem:[#allocation4 + $0x68] sm:$0xf]
    %v1982 = vld [vmem:[#allocation4 + $0x6c] sm:$0xf]
    %v1983 = vld [vmem:[#allocation4 + $0x70] sm:$0xf]
    %v1984 = vld [vmem:[#allocation4 + $0x74] sm:$0xf]
    %v1985 = vld [vmem:[#allocation4 + $0x78] sm:$0xf]
    %v1986 = vld [vmem:[#allocation4 + $0x7c] sm:$0xf]
    %v1987 = vld [vmem:[#allocation4 + $0x80] sm:$0xf]
    %v1988 = vld [vmem:[#allocation4 + $0x84] sm:$0xf]
    %v1989 = vld [vmem:[#allocation4 + $0x88] sm:$0xf]
    %v1990 = vld [vmem:[#allocation4 + $0x8c] sm:$0xf]
    %v1991 = vld [vmem:[#allocation4 + $0x90] sm:$0xf]
    %v1992 = vld [vmem:[#allocation4 + $0x94] sm:$0xf]
    %v1993 = vld [vmem:[#allocation4 + $0x98] sm:$0xf]
    %v1994 = vld [vmem:[#allocation4 + $0x9c] sm:$0xf]
    %v1995 = vld [vmem:[#allocation4 + $0xa0] sm:$0xf]
    %v1996 = vld [vmem:[#allocation4 + $0xa4] sm:$0xf]
    %v1997 = vld [vmem:[#allocation4 + $0xa8] sm:$0xf]
    %v1998 = vld [vmem:[#allocation4 + $0xac] sm:$0xf]
    %v1999 = vld [vmem:[#allocation4 + $0xb0] sm:$0xf]
    %v2000 = vld [vmem:[#allocation4 + $0xb4] sm:$0xf]
    %v2001 = vld [vmem:[#allocation4 + $0xb8] sm:$0xf]
    %v2002 = vld [vmem:[#allocation4 + $0xbc] sm:$0xf]
    %v2003 = vld [vmem:[#allocation4 + $0xc0] sm:$0xf]
    %v2004 = vld [vmem:[#allocation4 + $0xc4] sm:$0xf]
    %v2005 = vld [vmem:[#allocation4 + $0xc8] sm:$0xf]
    %v2006 = vld [vmem:[#allocation4 + $0xcc] sm:$0xf]
    %v2007 = vld [vmem:[#allocation4 + $0xd0] sm:$0xf]
    %v2008 = vld [vmem:[#allocation4 + $0xd4] sm:$0xf]
    %v2009 = vld [vmem:[#allocation4 + $0xd8] sm:$0xf]
    %v2010 = vld [vmem:[#allocation4 + $0xdc] sm:$0xf]
    %v2011 = vld [vmem:[#allocation4 + $0xe0] sm:$0xf]
    %v2012 = vld [vmem:[#allocation4 + $0xe4] sm:$0xf]
    %v2013 = vld [vmem:[#allocation4 + $0xe8] sm:$0xf]
    %v2014 = vld [vmem:[#allocation4 + $0xec] sm:$0xf]
    %v2015 = vld [vmem:[#allocation4 + $0xf0] sm:$0xf]
    %v2016 = vld [vmem:[#allocation4 + $0xf4] sm:$0xf]
    %v2017 = vld [vmem:[#allocation4 + $0xf8] sm:$0xf]
    %v2018 = vld [vmem:[#allocation4 + $0xfc] sm:$0xf]
    %v2019 = vld [vmem:[%s4] sm:$0x1]
    %v2021 = vlaneseq
    %v2022 = vshrl.u32 %v2021, 7
    %v2023 = vsub.s32 0, %v2022
    %v2024 = vrot.slane %v2019, %v2023
    %v2090 = vunpack.c.l.b16 %v1955
    %v2091 = vunpack.c.l.b16 %v1956
    %v2092 = vunpack.c.l.b16 %v1957
    %v2093 = vunpack.c.l.b16 %v1958
    %v2094 = vunpack.c.l.b16 %v1959
    %v2095 = vunpack.c.l.b16 %v1960
    %v2096 = vunpack.c.l.b16 %v1961
    %v2097 = vunpack.c.l.b16 %v1962
    %v2098 = vunpack.c.l.b16 %v1963
    %v2099 = vunpack.c.l.b16 %v1964
    %v2100 = vunpack.c.l.b16 %v1965
    %v2101 = vunpack.c.l.b16 %v1966
    %v2102 = vunpack.c.l.b16 %v1967
    %v2103 = vunpack.c.l.b16 %v1968
    %v2104 = vunpack.c.l.b16 %v1969
    %v2105 = vunpack.c.l.b16 %v1970
    %v2106 = vunpack.c.l.b16 %v1971
    %v2107 = vunpack.c.l.b16 %v1972
    %v2108 = vunpack.c.l.b16 %v1973
    %v2109 = vunpack.c.l.b16 %v1974
    %v2110 = vunpack.c.l.b16 %v1975
    %v2111 = vunpack.c.l.b16 %v1976
    %v2112 = vunpack.c.l.b16 %v1977
    %v2113 = vunpack.c.l.b16 %v1978
    %v2114 = vunpack.c.l.b16 %v1979
    %v2115 = vunpack.c.l.b16 %v1980
    %v2116 = vunpack.c.l.b16 %v1981
    %v2117 = vunpack.c.l.b16 %v1982
    %v2118 = vunpack.c.l.b16 %v1983
    %v2119 = vunpack.c.l.b16 %v1984
    %v2120 = vunpack.c.l.b16 %v1985
    %v2121 = vunpack.c.l.b16 %v1986
    %v2122 = vunpack.c.l.b16 %v1987
    %v2123 = vunpack.c.l.b16 %v1988
    %v2124 = vunpack.c.l.b16 %v1989
    %v2125 = vunpack.c.l.b16 %v1990
    %v2126 = vunpack.c.l.b16 %v1991
    %v2127 = vunpack.c.l.b16 %v1992
    %v2128 = vunpack.c.l.b16 %v1993
    %v2129 = vunpack.c.l.b16 %v1994
    %v2130 = vunpack.c.l.b16 %v1995
    %v2131 = vunpack.c.l.b16 %v1996
    %v2132 = vunpack.c.l.b16 %v1997
    %v2133 = vunpack.c.l.b16 %v1998
    %v2134 = vunpack.c.l.b16 %v1999
    %v2135 = vunpack.c.l.b16 %v2000
    %v2136 = vunpack.c.l.b16 %v2001
    %v2137 = vunpack.c.l.b16 %v2002
    %v2138 = vunpack.c.l.b16 %v2003
    %v2139 = vunpack.c.l.b16 %v2004
    %v2140 = vunpack.c.l.b16 %v2005
    %v2141 = vunpack.c.l.b16 %v2006
    %v2142 = vunpack.c.l.b16 %v2007
    %v2143 = vunpack.c.l.b16 %v2008
    %v2144 = vunpack.c.l.b16 %v2009
    %v2145 = vunpack.c.l.b16 %v2010
    %v2146 = vunpack.c.l.b16 %v2011
    %v2147 = vunpack.c.l.b16 %v2012
    %v2148 = vunpack.c.l.b16 %v2013
    %v2149 = vunpack.c.l.b16 %v2014
    %v2150 = vunpack.c.l.b16 %v2015
    %v2151 = vunpack.c.l.b16 %v2016
    %v2152 = vunpack.c.l.b16 %v2017
    %v2153 = vunpack.c.l.b16 %v2018
    %v2154 = vpack.c.b16 %v2091, %v2090
    %v2155 = vpack.c.b16 %v2093, %v2092
    %v2156 = vpack.c.b16 %v2095, %v2094
    %v2157 = vpack.c.b16 %v2097, %v2096
    %v2158 = vpack.c.b16 %v2099, %v2098
    %v2159 = vpack.c.b16 %v2101, %v2100
    %v2160 = vpack.c.b16 %v2103, %v2102
    %v2161 = vpack.c.b16 %v2105, %v2104
    %v2162 = vpack.c.b16 %v2107, %v2106
    %v2163 = vpack.c.b16 %v2109, %v2108
    %v2164 = vpack.c.b16 %v2111, %v2110
    %v2165 = vpack.c.b16 %v2113, %v2112
    %v2166 = vpack.c.b16 %v2115, %v2114
    %v2167 = vpack.c.b16 %v2117, %v2116
    %v2168 = vpack.c.b16 %v2119, %v2118
    %v2169 = vpack.c.b16 %v2121, %v2120
    %v2170 = vpack.c.b16 %v2123, %v2122
    %v2171 = vpack.c.b16 %v2125, %v2124
    %v2172 = vpack.c.b16 %v2127, %v2126
    %v2173 = vpack.c.b16 %v2129, %v2128
    %v2174 = vpack.c.b16 %v2131, %v2130
    %v2175 = vpack.c.b16 %v2133, %v2132
    %v2176 = vpack.c.b16 %v2135, %v2134
    %v2177 = vpack.c.b16 %v2137, %v2136
    %v2178 = vpack.c.b16 %v2139, %v2138
    %v2179 = vpack.c.b16 %v2141, %v2140
    %v2180 = vpack.c.b16 %v2143, %v2142
    %v2181 = vpack.c.b16 %v2145, %v2144
    %v2182 = vpack.c.b16 %v2147, %v2146
    %v2183 = vpack.c.b16 %v2149, %v2148
    %v2184 = vpack.c.b16 %v2151, %v2150
    %v2185 = vpack.c.b16 %v2153, %v2152
    %2218 = vmatprep.subr.bf16.mxu0 0
    %2219 = vmatpush1.bf16.msra.mxu0 %v2154
    %2220 = vmatprep.subr.bf16.mxu0 0
    %2221 = vmatpush1.bf16.msra.mxu0 %v2155
    %2222 = vmatprep.subr.bf16.mxu0 0
    %2223 = vmatpush1.bf16.msra.mxu0 %v2156
    %2224 = vmatprep.subr.bf16.mxu0 0
    %2225 = vmatpush1.bf16.msra.mxu0 %v2157
    %2226 = vmatprep.subr.bf16.mxu0 0
    %2227 = vmatpush1.bf16.msra.mxu0 %v2158
    %2228 = vmatprep.subr.bf16.mxu0 0
    %2229 = vmatpush1.bf16.msra.mxu0 %v2159
    %2230 = vmatprep.subr.bf16.mxu0 0
    %2231 = vmatpush1.bf16.msra.mxu0 %v2160
    %2232 = vmatprep.subr.bf16.mxu0 0
    %2233 = vmatpush1.bf16.msra.mxu0 %v2161
    %2234 = vmatprep.subr.bf16.mxu0 0
    %2235 = vmatpush1.bf16.msra.mxu0 %v2162
    %2236 = vmatprep.subr.bf16.mxu0 0
    %2237 = vmatpush1.bf16.msra.mxu0 %v2163
    %2238 = vmatprep.subr.bf16.mxu0 0
    %2239 = vmatpush1.bf16.msra.mxu0 %v2164
    %2240 = vmatprep.subr.bf16.mxu0 0
    %2241 = vmatpush1.bf16.msra.mxu0 %v2165
    %2242 = vmatprep.subr.bf16.mxu0 0
    %2243 = vmatpush1.bf16.msra.mxu0 %v2166
    %2244 = vmatprep.subr.bf16.mxu0 0
    %2245 = vmatpush1.bf16.msra.mxu0 %v2167
    %2246 = vmatprep.subr.bf16.mxu0 0
    %2247 = vmatpush1.bf16.msra.mxu0 %v2168
    %2248 = vmatprep.subr.bf16.mxu0 0
    %2249 = vmatpush1.bf16.msra.mxu0 %v2169
    %2250 = vmatprep.mubr.bf16.mxu0 %v1952
    %2251 = vmatmul.mubr.bf16.gmra.mrb[0].mxu0 %v1951
    %v2252 = vpop.f32.mrb[0].mxu0
    %v2253 = vadd.f32 %v2024, %v2252
    %v2254 = vpop.f32.mrb[0].mxu0
    %v2255 = vpop.f32.mrb[0].mxu0
    %v2256 = vpop.f32.mrb[0].mxu0
    %2257 = vdwg.mxu0
    %2258 = vmatprep.subr.bf16.mxu0 0
    %2259 = vmatpush1.bf16.msra.mxu0 %v2170
    %2260 = vmatprep.subr.bf16.mxu0 0
    %2261 = vmatpush1.bf16.msra.mxu0 %v2171
    %2262 = vmatprep.subr.bf16.mxu0 0
    %2263 = vmatpush1.bf16.msra.mxu0 %v2172
    %2264 = vmatprep.subr.bf16.mxu0 0
    %2265 = vmatpush1.bf16.msra.mxu0 %v2173
    %2266 = vmatprep.subr.bf16.mxu0 0
    %2267 = vmatpush1.bf16.msra.mxu0 %v2174
    %2268 = vmatprep.subr.bf16.mxu0 0
    %2269 = vmatpush1.bf16.msra.mxu0 %v2175
    %2270 = vmatprep.subr.bf16.mxu0 0
    %2271 = vmatpush1.bf16.msra.mxu0 %v2176
    %2272 = vmatprep.subr.bf16.mxu0 0
    %2273 = vmatpush1.bf16.msra.mxu0 %v2177
    %2274 = vmatprep.subr.bf16.mxu0 0
    %2275 = vmatpush1.bf16.msra.mxu0 %v2178
    %2276 = vmatprep.subr.bf16.mxu0 0
    %2277 = vmatpush1.bf16.msra.mxu0 %v2179
    %2278 = vmatprep.subr.bf16.mxu0 0
    %2279 = vmatpush1.bf16.msra.mxu0 %v2180
    %2280 = vmatprep.subr.bf16.mxu0 0
    %2281 = vmatpush1.bf16.msra.mxu0 %v2181
    %2282 = vmatprep.subr.bf16.mxu0 0
    %2283 = vmatpush1.bf16.msra.mxu0 %v2182
    %2284 = vmatprep.subr.bf16.mxu0 0
    %2285 = vmatpush1.bf16.msra.mxu0 %v2183
    %2286 = vmatprep.subr.bf16.mxu0 0
    %2287 = vmatpush1.bf16.msra.mxu0 %v2184
    %2288 = vmatprep.subr.bf16.mxu0 0
    %2289 = vmatpush1.bf16.msra.mxu0 %v2185
    %2290 = vmatprep.mubr.bf16.mxu0 %v1954
    %2291 = vmatmul.mubr.bf16.gmra.mrb[0].mxu0 %v1953
    %v2292 = vpop.f32.mrb[0].mxu0
    %v2293 = vadd.f32 %v2253, %v2292
    %v2294 = vpop.f32.mrb[0].mxu0
    %v2295 = vpop.f32.mrb[0].mxu0
    %v2296 = vpop.f32.mrb[0].mxu0
    %2297 = vdwg.mxu0
    %2298 = vst [vmem:[%s5] sm:$0xff] %v2293
    // Predicated region
    $region30: #{classblock_forward.1} parent=1 // pred_check
      _
    $region31: #{classblock_forward.1} parent=1 // pred_check_branch
      %2300 = sbr.rel (0) target = $region33
    $region32: #{classblock_forward.1} parent=1 // pred_region
      _
    $region33: #{classblock_forward.1} parent=1 // pred_fallthru
      _
    // Predicated region
    $region34: #{classblock_forward.1} parent=1 // pred_check
      _
    $region35: #{classblock_forward.1} parent=1 // pred_check_branch
      %2302 = sbr.rel (0) target = $region37
    $region36: #{classblock_forward.1} parent=1 // pred_region
      _
    $region37: #{classblock_forward.1} parent=1 // pred_fallthru
      _
    %2303 = vsyncpa [#allocation3], 1
    %2304 = vsyncpa [#allocation5], 1

</llo_original>
